<compile_context>
chip_gen: v7x
topology: tpu7x:2x2x1
jax: 0.10.0
libtpu: 0.0.40
codegen_flags: <defaults>
</compile_context>

<pallas_src>
import jax
import jax.numpy as jnp
from jax import lax
from jax.experimental import pallas as pl
from jax.experimental.pallas import tpu as pltpu


def _make_kernel(N, Cq_pad, TQ, return_attention):
    n_proj_tiles = N // TQ

    def kernel(x_ref, wq_ref, bq_ref, wkv_ref, bkv_ref, gamma_ref, *refs):
        if return_attention:
            out_ref, attn_ref, k_s, v_s = refs
        else:
            out_ref, k_s, v_s = refs
            attn_ref = None

        qi = pl.program_id(1)

        # ---- once per batch element: fused K|V projection into lane-dense
        # scratch, tiled over N so the f32 intermediate stays vreg-friendly
        # regardless of N (no giant (N, Ctot) temp at step 0).
        @pl.when(qi == 0)
        def _():
            def proj_tile(t, carry):
                start = pl.multiple_of(t * TQ, TQ)
                x_c = x_ref[0, :, pl.ds(start, TQ)]                  # (C, TQ) f32
                kv = jnp.dot(wkv_ref[...], x_c,
                             preferred_element_type=jnp.float32) + bkv_ref[...]
                k_s[:, pl.ds(start, TQ)] = kv[:Cq_pad, :]            # f32
                v_s[:, pl.ds(start, TQ)] = kv[Cq_pad:, :].astype(jnp.bfloat16)
                return carry
            lax.fori_loop(0, n_proj_tiles, proj_tile, 0)

        qs = pl.multiple_of(qi * TQ, TQ)
        x_tile = x_ref[0, :, pl.ds(qs, TQ)]                          # (C, TQ) f32

        # per-tile Q projection (spread across grid steps).
        q = jnp.dot(wq_ref[...], x_tile,
                    preferred_element_type=jnp.float32) + bq_ref[...]  # (Cq_pad, TQ)

        # energy^T[j, i] = <k_j, q_i>  (== torch energy[i, j]); (N, TQ) keeps
        # everything downstream lane-dense in the query dimension.
        energy_t = lax.dot_general(
            k_s[...], q, dimension_numbers=(((0,), (0,)), ((), ())),
            preferred_element_type=jnp.float32)                      # (N, TQ) f32

        # softmax over keys (axis 0 here == torch softmax(dim=-1)).
        e_max = jnp.max(energy_t, axis=0, keepdims=True)             # (1, TQ)
        p = jnp.exp(energy_t - e_max)
        denom = jnp.sum(p, axis=0, keepdims=True)                    # (1, TQ)
        # exact reciprocal when the attention map is returned to the caller;
        # approx (EUP, basically free) on the fast path.
        inv = pl.reciprocal(denom, approx=not return_attention)
        attn_t = p * inv                                             # (N, TQ) f32

        if return_attention:
            # torch layout attention[i, j]: in-kernel XLU transpose into a
            # lane-dense (TQ, N) block (avoids a second (B,N,N) HBM pass).
            attn_ref[0] = jnp.transpose(attn_t).astype(attn_ref.dtype)

        # out[c, i] = sum_j v[c, j] * attn^T[j, i]  -> (C, TQ); MXU-native
        # contraction and a lane-dense store.
        out = lax.dot_general(
            v_s[...], attn_t.astype(jnp.bfloat16),
            dimension_numbers=(((1,), (0,)), ((), ())),
            preferred_element_type=jnp.float32)                      # (C, TQ) f32

        out_ref[0] = gamma_ref[0, 0] * out + x_tile

    return kernel


def _round_up(x, m):
    return ((x + m - 1) // m) * m


def _pick_tq(N, tq_max):
    """Largest multiple-of-128 divisor of N that is <= tq_max (lane-dense out
    stores); otherwise fall back to a single full-width tile (block dims then
    equal the full array dims, which always satisfies the (8,128) rule)."""
    cand = (min(tq_max, N) // 128) * 128
    while cand >= 128:
        if N % cand == 0:
            return cand
        cand -= 128
    return N


def self_attn_pallas(x_nchw, wq, bq, wk, bk, wv, bv, gamma, *,
                     tq=None, return_attention=True, attn_dtype=jnp.float32):
    """SAGAN Self_Attn forward.  x_nchw: (B, C, W, H) f32.
    Returns (out_nchw, attention) or just out_nchw."""
    B, C, W, H = x_nchw.shape
    N = W * H
    Cq = wq.shape[0]
    Cq_pad = max(8, _round_up(Cq, 8))        # sublane-aligned Q/K feature dim

    # ---- per-chip VMEM budgeting -------------------------------------------
    vmem_cap = None
    try:
        info = pltpu.get_tpu_info()
        for attr in ("vmem_capacity_bytes", "vmem_bytes", "vmem_size_bytes"):
            v = getattr(info, attr, None)
            if isinstance(v, int) and v > 0:
                vmem_cap = v
                break
    except Exception:
        pass
    if vmem_cap is None:
        vmem_cap = 64 * 1024 * 1024          # conservative (v7x-sized) fallback
    # leave headroom for double buffers / internal scratch:
    #   v7x (64 MiB physical per TC) -> 48 MiB; v5e/v6e (128 MiB) -> ~96 MiB.
    vmem_limit = max(32 * 1024 * 1024,
                     min((vmem_cap * 3) // 4, 110 * 1024 * 1024))
    if tq is None:
        tq = 256 if vmem_cap >= (96 << 20) else 128
    TQ = _pick_tq(N, tq)
    num_q_tiles = N // TQ

    # ---- channel-major data: no NCHW<->NHWC transposes anywhere -------------
    f32 = jnp.float32
    x_flat = x_nchw.reshape(B, C, N).astype(f32)

    wq_p = jnp.zeros((Cq_pad, C), f32).at[:Cq, :].set(wq.astype(f32))
    bq_p = jnp.zeros((Cq_pad, 1), f32).at[:Cq, 0].set(bq.astype(f32))
    wk_p = jnp.zeros((Cq_pad, C), f32).at[:Cq, :].set(wk.astype(f32))
    bk_p = jnp.zeros((Cq_pad, 1), f32).at[:Cq, 0].set(bk.astype(f32))
    # fused K|V projection; the row split falls on a sublane-tile boundary.
    w_kv = jnp.concatenate([wk_p, wv.astype(f32)], axis=0)           # (Cq_pad+C, C)
    b_kv = jnp.concatenate([bk_p, bv.astype(f32).reshape(C, 1)], axis=0)
    gamma2 = gamma.reshape(1, 1).astype(f32)

    out_shape = [jax.ShapeDtypeStruct((B, C, N), f32)]
    out_specs = [pl.BlockSpec((1, C, TQ), lambda b, qi: (b, 0, qi))]
    if return_attention:
        out_shape.append(jax.ShapeDtypeStruct((B, N, N), attn_dtype))
        out_specs.append(pl.BlockSpec((1, TQ, N), lambda b, qi: (b, qi, 0)))

    kernel = _make_kernel(N, Cq_pad, TQ, return_attention)

    results = pl.pallas_call(
        kernel,
        out_shape=tuple(out_shape),
        grid_spec=pltpu.PrefetchScalarGridSpec(
            num_scalar_prefetch=0,
            grid=(B, num_q_tiles),
            in_specs=[
                # full per-batch x (channel-major); constant over qi so it is
                # DMA'd once per batch element and stays resident.
                pl.BlockSpec((1, C, N), lambda b, qi: (b, 0, 0)),
                # grid-invariant weights / biases: VMEM-resident.
                pl.BlockSpec((Cq_pad, C), lambda b, qi: (0, 0)),
                pl.BlockSpec((Cq_pad, 1), lambda b, qi: (0, 0)),
                pl.BlockSpec((Cq_pad + C, C), lambda b, qi: (0, 0)),
                pl.BlockSpec((Cq_pad + C, 1), lambda b, qi: (0, 0)),
                # gamma as a scalar in SMEM.
                pl.BlockSpec(memory_space=pltpu.MemorySpace.SMEM),
            ],
            out_specs=out_specs,
            scratch_shapes=[
                pltpu.VMEM((Cq_pad, N), jnp.float32),   # K, feature-major (lane-dense)
                pltpu.VMEM((C, N), jnp.bfloat16),       # V, channel-major (lane-dense)
            ],
        ),
        compiler_params=pltpu.CompilerParams(
            # batch axis parallel (megacore); the query-tile axis carries the
            # K/V-scratch dependency -> arbitrary.
            dimension_semantics=("parallel", "arbitrary"),
            vmem_limit_bytes=vmem_limit,
        ),
    )(x_flat, wq_p, bq_p, w_kv, b_kv, gamma2)

    out_nchw = results[0].reshape(B, C, W, H)
    if return_attention:
        return out_nchw, results[1]
    return out_nchw


def _reference(x_nchw, wq, bq, wk, bk, wv, bv, gamma):
    """Plain-JAX reference reproducing the torch forward for validation."""
    B, C, W, H = x_nchw.shape
    N = W * H
    proj_q = (jnp.einsum('bchw,oc->bohw', x_nchw, wq) + bq[None, :, None, None]
              ).reshape(B, -1, N).transpose(0, 2, 1)                 # (B, N, Cq)
    proj_k = (jnp.einsum('bchw,oc->bohw', x_nchw, wk) + bk[None, :, None, None]
              ).reshape(B, -1, N)                                    # (B, Cq, N)
    energy = jnp.einsum('bnc,bcm->bnm', proj_q, proj_k)
    attn = jax.nn.softmax(energy, axis=-1)
    proj_v = (jnp.einsum('bchw,oc->bohw', x_nchw, wv) + bv[None, :, None, None]
              ).reshape(B, -1, N)                                    # (B, C, N)
    out = jnp.einsum('bcn,bmn->bcm', proj_v, attn)                   # (B, C, N)
    out = out.reshape(B, C, W, H)
    out = gamma[0] * out + x_nchw
    return out, attn


if __name__ == "__main__":
    key = jax.random.PRNGKey(0)
    B, C, W, H = 2, 32, 16, 16        # in_dim=32 so in_dim//8 = 4; N = 256
    Cq = C // 8

    ks = jax.random.split(key, 8)
    x = jax.random.normal(ks[0], (B, C, W, H), dtype=jnp.float32)
    wq = jax.random.normal(ks[1], (Cq, C), dtype=jnp.float32) * 0.1   # 1x1 conv weight (out, in)
    bq = jax.random.normal(ks[2], (Cq,), dtype=jnp.float32) * 0.1
    wk = jax.random.normal(ks[3], (Cq, C), dtype=jnp.float32) * 0.1
    bk = jax.random.normal(ks[4], (Cq,), dtype=jnp.float32) * 0.1
    wv = jax.random.normal(ks[5], (C, C), dtype=jnp.float32) * 0.1
    bv = jax.random.normal(ks[6], (C,), dtype=jnp.float32) * 0.1
    # Module initializes gamma = 0; nonzero here so the residual path is exercised.
    gamma = jnp.array([0.5], dtype=jnp.float32)

    # tq=128 -> two query tiles per batch element (exercises the multi-tile path).
    out, attn = self_attn_pallas(x, wq, bq, wk, bk, wv, bv, gamma,
                                 tq=128, return_attention=True)
    # default tq (single-tile on 128 MiB parts) + fast path without attention.
    out_fast = self_attn_pallas(x, wq, bq, wk, bk, wv, bv, gamma,
                                return_attention=False)
    jax.block_until_ready((out, attn, out_fast))

    ref_out, ref_attn = _reference(x, wq, bq, wk, bk, wv, bv, gamma)

    assert out.shape == (B, C, W, H) and attn.shape == (B, W * H, W * H)
    # bf16 V / attn operands in the second matmul => loosened tolerances vs f32 ref.
    assert jnp.allclose(out, ref_out, atol=1e-2, rtol=1e-2), "output mismatch"
    assert jnp.allclose(attn, ref_attn, atol=3e-3, rtol=3e-2), "attention mismatch"
    assert jnp.allclose(out_fast, ref_out, atol=1e-2, rtol=1e-2), "no-attention variant mismatch"

    print("KERNEL_OK")
</pallas_src>

<mosaic_0001>
module attributes {stable_mosaic.version = 11 : i64} {
  func.func @kernel(%arg0: i32, %arg1: i32, %arg2: memref<1x32x256xf32, #tpu.memory_space<vmem>>, %arg3: memref<8x32xf32, #tpu.memory_space<vmem>>, %arg4: memref<8x1xf32, #tpu.memory_space<vmem>>, %arg5: memref<40x32xf32, #tpu.memory_space<vmem>>, %arg6: memref<40x1xf32, #tpu.memory_space<vmem>>, %arg7: memref<1x1xf32, #tpu.memory_space<smem>>, %arg8: memref<1x32x128xf32, #tpu.memory_space<vmem>>, %arg9: memref<1x128x256xf32, #tpu.memory_space<vmem>>, %arg10: memref<8x256xf32, #tpu.memory_space<vmem>>, %arg11: memref<32x256xbf16, #tpu.memory_space<vmem>>) attributes {dimension_semantics = [#tpu.dimension_semantics<parallel>, #tpu.dimension_semantics<arbitrary>], iteration_bounds = array<i64: 2, 2>, scalar_prefetch = 0 : i64, scratch_operands = 2 : i64, tpu.core_type = #tpu.core_type<tc>, window_params = [{transform_indices = @transform_0, window_bounds = array<i64: 1, 32, 256>}, {pipeline_mode = #tpu.pipeline_mode<synchronous>, transform_indices = @transform_1, window_bounds = array<i64: 8, 32>}, {pipeline_mode = #tpu.pipeline_mode<synchronous>, transform_indices = @transform_2, window_bounds = array<i64: 8, 1>}, {pipeline_mode = #tpu.pipeline_mode<synchronous>, transform_indices = @transform_3, window_bounds = array<i64: 40, 32>}, {pipeline_mode = #tpu.pipeline_mode<synchronous>, transform_indices = @transform_4, window_bounds = array<i64: 40, 1>}, {transform_indices = @transform_5, window_bounds = array<i64: 1, 1>}, {transform_indices = @transform_6, window_bounds = array<i64: 1, 32, 128>}, {transform_indices = @transform_7, window_bounds = array<i64: 1, 128, 256>}]} {
    %c0_i32 = arith.constant 0 : i32
    %0 = arith.cmpi eq, %arg1, %c0_i32 : i32
    %1 = arith.extui %0 : i1 to i32
    %c0_i32_0 = arith.constant 0 : i32
    %2 = arith.cmpi ne, %1, %c0_i32_0 : i32
    scf.if %2 {
      %c0_i32_22 = arith.constant 0 : i32
      %c2_i32 = arith.constant 2 : i32
      %39 = arith.addi %c0_i32_22, %c2_i32 : i32
      %c1_i32 = arith.constant 1 : i32
      scf.for %arg12 = %c0_i32_22 to %39 step %c1_i32  : i32 {
        %c128_i32_24 = arith.constant 128 : i32
        %40 = arith.muli %arg12, %c128_i32_24 : i32
        %41 = tpu.assume_multiple %40, 128 : i32
        %c0_25 = arith.constant 0 : index
        %c0_26 = arith.constant 0 : index
        %42 = arith.index_cast %41 : i32 to index
        %43 = vector.load %arg2[%c0_25, %c0_26, %42] : memref<1x32x256xf32, #tpu.memory_space<vmem>>, vector<1x32x128xf32>
        %44 = vector.shape_cast %43 : vector<1x32x128xf32> to vector<32x128xf32>
        %c0_27 = arith.constant 0 : index
        %c0_28 = arith.constant 0 : index
        %45 = vector.load %arg5[%c0_27, %c0_28] : memref<40x32xf32, #tpu.memory_space<vmem>>, vector<40x32xf32>
        %cst_29 = arith.constant dense<0.000000e+00> : vector<40x128xf32>
        %46 = tpu.matmul %45, %44, %cst_29 {dimension_numbers = #tpu.dot_dimension_numbers<[1], [0], [0], [1], [0, 0, 1, 1], [], []>} : vector<40x32xf32>, vector<32x128xf32>, vector<40x128xf32> -> vector<40x128xf32>
        %c0_30 = arith.constant 0 : index
        %c0_31 = arith.constant 0 : index
        %47 = vector.load %arg6[%c0_30, %c0_31] : memref<40x1xf32, #tpu.memory_space<vmem>>, vector<40x1xf32>
        %48 = vector.broadcast %47 : vector<40x1xf32> to vector<40x128xf32>
        %49 = arith.addf %46, %48 : vector<40x128xf32>
        %50 = vector.extract_strided_slice %49 {offsets = [0, 0], sizes = [8, 128], strides = [1, 1]} : vector<40x128xf32> to vector<8x128xf32>
        %c0_32 = arith.constant 0 : index
        %51 = arith.index_cast %41 : i32 to index
        %52 = vector.load %arg10[%c0_32, %51] : memref<8x256xf32, #tpu.memory_space<vmem>>, vector<8x128xf32>
        tpu.vector_store %arg10[%c0_32, %51], %50 {strides = array<i32>} : memref<8x256xf32, #tpu.memory_space<vmem>>, vector<8x128xf32>,
        %53 = vector.extract_strided_slice %49 {offsets = [8, 0], sizes = [32, 128], strides = [1, 1]} : vector<40x128xf32> to vector<32x128xf32>
        %54 = arith.truncf %53 : vector<32x128xf32> to vector<32x128xbf16>
        %c0_33 = arith.constant 0 : index
        %55 = arith.index_cast %41 : i32 to index
        %56 = vector.load %arg11[%c0_33, %55] : memref<32x256xbf16, #tpu.memory_space<vmem>>, vector<32x128xbf16>
        tpu.vector_store %arg11[%c0_33, %55], %54 {strides = array<i32>} : memref<32x256xbf16, #tpu.memory_space<vmem>>, vector<32x128xbf16>,
      }
      %c2_i32_23 = arith.constant 2 : i32
    } else {
    }
    %c128_i32 = arith.constant 128 : i32
    %3 = arith.muli %arg1, %c128_i32 : i32
    %4 = tpu.assume_multiple %3, 128 : i32
    %c0 = arith.constant 0 : index
    %c0_1 = arith.constant 0 : index
    %5 = arith.index_cast %4 : i32 to index
    %6 = vector.load %arg2[%c0, %c0_1, %5] : memref<1x32x256xf32, #tpu.memory_space<vmem>>, vector<1x32x128xf32>
    %7 = vector.shape_cast %6 : vector<1x32x128xf32> to vector<32x128xf32>
    %c0_2 = arith.constant 0 : index
    %c0_3 = arith.constant 0 : index
    %8 = vector.load %arg3[%c0_2, %c0_3] : memref<8x32xf32, #tpu.memory_space<vmem>>, vector<8x32xf32>
    %cst = arith.constant dense<0.000000e+00> : vector<8x128xf32>
    %9 = tpu.matmul %8, %7, %cst {dimension_numbers = #tpu.dot_dimension_numbers<[1], [0], [0], [1], [0, 0, 1, 1], [], []>} : vector<8x32xf32>, vector<32x128xf32>, vector<8x128xf32> -> vector<8x128xf32>
    %c0_4 = arith.constant 0 : index
    %c0_5 = arith.constant 0 : index
    %10 = vector.load %arg4[%c0_4, %c0_5] : memref<8x1xf32, #tpu.memory_space<vmem>>, vector<8x1xf32>
    %11 = vector.broadcast %10 : vector<8x1xf32> to vector<8x128xf32>
    %12 = arith.addf %9, %11 : vector<8x128xf32>
    %c0_6 = arith.constant 0 : index
    %c0_7 = arith.constant 0 : index
    %13 = vector.load %arg10[%c0_6, %c0_7] : memref<8x256xf32, #tpu.memory_space<vmem>>, vector<8x256xf32>
    %cst_8 = arith.constant dense<0.000000e+00> : vector<256x128xf32>
    %14 = tpu.matmul %13, %12, %cst_8 {dimension_numbers = #tpu.dot_dimension_numbers<[0], [0], [1], [1], [0, 1, 1, 1], [], []>} : vector<8x256xf32>, vector<8x128xf32>, vector<256x128xf32> -> vector<256x128xf32>
    %cst_9 = arith.constant dense<0xFF800000> : vector<128xf32>
    %15 = vector.multi_reduction <maximumf>, %14, %cst_9 [0] : vector<256x128xf32> to vector<128xf32>
    %16 = vector.shape_cast %15 : vector<128xf32> to vector<1x128xf32>
    %17 = vector.broadcast %16 : vector<1x128xf32> to vector<256x128xf32>
    %18 = arith.subf %14, %17 : vector<256x128xf32>
    %19 = math.exp %18 : vector<256x128xf32>
    %cst_10 = arith.constant dense<0.000000e+00> : vector<128xf32>
    %20 = vector.multi_reduction <add>, %19, %cst_10 [0] : vector<256x128xf32> to vector<128xf32>
    %21 = vector.shape_cast %20 : vector<128xf32> to vector<1x128xf32>
    %22 = tpu.reciprocal %21 : vector<1x128xf32> -> vector<1x128xf32>
    %23 = vector.broadcast %22 : vector<1x128xf32> to vector<256x128xf32>
    %24 = arith.mulf %19, %23 : vector<256x128xf32>
    %25 = tpu.transpose %24, [1, 0] : vector<256x128xf32> -> vector<128x256xf32>
    %c0_11 = arith.constant 0 : index
    %c0_12 = arith.constant 0 : index
    %c0_13 = arith.constant 0 : index
    %26 = vector.load %arg9[%c0_11, %c0_12, %c0_13] : memref<1x128x256xf32, #tpu.memory_space<vmem>>, vector<1x128x256xf32>
    %27 = vector.shape_cast %26 : vector<1x128x256xf32> to vector<128x256xf32>
    %28 = vector.shape_cast %25 : vector<128x256xf32> to vector<1x128x256xf32>
    tpu.vector_store %arg9[%c0_11, %c0_12, %c0_13], %28 {strides = array<i32>} : memref<1x128x256xf32, #tpu.memory_space<vmem>>, vector<1x128x256xf32>,
    %c0_14 = arith.constant 0 : index
    %c0_15 = arith.constant 0 : index
    %29 = vector.load %arg11[%c0_14, %c0_15] : memref<32x256xbf16, #tpu.memory_space<vmem>>, vector<32x256xbf16>
    %30 = arith.truncf %24 : vector<256x128xf32> to vector<256x128xbf16>
    %cst_16 = arith.constant dense<0.000000e+00> : vector<32x128xf32>
    %31 = tpu.matmul %29, %30, %cst_16 {dimension_numbers = #tpu.dot_dimension_numbers<[1], [0], [0], [1], [0, 0, 1, 1], [], []>} : vector<32x256xbf16>, vector<256x128xbf16>, vector<32x128xf32> -> vector<32x128xf32>
    %c0_17 = arith.constant 0 : index
    %c0_18 = arith.constant 0 : index
    %32 = memref.load %arg7[%c0_17, %c0_18] : memref<1x1xf32, #tpu.memory_space<smem>>
    %33 = vector.broadcast %32 : f32 to vector<32x128xf32>
    %34 = arith.mulf %33, %31 : vector<32x128xf32>
    %35 = arith.addf %34, %7 : vector<32x128xf32>
    %c0_19 = arith.constant 0 : index
    %c0_20 = arith.constant 0 : index
    %c0_21 = arith.constant 0 : index
    %36 = vector.load %arg8[%c0_19, %c0_20, %c0_21] : memref<1x32x128xf32, #tpu.memory_space<vmem>>, vector<1x32x128xf32>
    %37 = vector.shape_cast %36 : vector<1x32x128xf32> to vector<32x128xf32>
    %38 = vector.shape_cast %35 : vector<32x128xf32> to vector<1x32x128xf32>
    tpu.vector_store %arg8[%c0_19, %c0_20, %c0_21], %38 {strides = array<i32>} : memref<1x32x128xf32, #tpu.memory_space<vmem>>, vector<1x32x128xf32>,
    return
  }
  func.func @transform_0(%arg0: i32, %arg1: i32) -> (i32, i32, i32) {
    %c0_i32 = arith.constant 0 : i32
    %c0_i32_0 = arith.constant 0 : i32
    %c0_i32_1 = arith.constant 0 : i32
    return %arg0, %c0_i32, %c0_i32_0 : i32, i32, i32
  }
  func.func @transform_1(%arg0: i32, %arg1: i32) -> (i32, i32) {
    %c0_i32 = arith.constant 0 : i32
    %c0_i32_0 = arith.constant 0 : i32
    %c0_i32_1 = arith.constant 0 : i32
    return %c0_i32, %c0_i32_0 : i32, i32
  }
  func.func @transform_2(%arg0: i32, %arg1: i32) -> (i32, i32) {
    %c0_i32 = arith.constant 0 : i32
    %c0_i32_0 = arith.constant 0 : i32
    %c0_i32_1 = arith.constant 0 : i32
    return %c0_i32, %c0_i32_0 : i32, i32
  }
  func.func @transform_3(%arg0: i32, %arg1: i32) -> (i32, i32) {
    %c0_i32 = arith.constant 0 : i32
    %c0_i32_0 = arith.constant 0 : i32
    %c0_i32_1 = arith.constant 0 : i32
    return %c0_i32, %c0_i32_0 : i32, i32
  }
  func.func @transform_4(%arg0: i32, %arg1: i32) -> (i32, i32) {
    %c0_i32 = arith.constant 0 : i32
    %c0_i32_0 = arith.constant 0 : i32
    %c0_i32_1 = arith.constant 0 : i32
    return %c0_i32, %c0_i32_0 : i32, i32
  }
  func.func @transform_5(%arg0: i32, %arg1: i32) -> (i32, i32) {
    %c0_i32 = arith.constant 0 : i32
    %c0_i32_0 = arith.constant 0 : i32
    %c0_i32_1 = arith.constant 0 : i32
    return %c0_i32, %c0_i32_0 : i32, i32
  }
  func.func @transform_6(%arg0: i32, %arg1: i32) -> (i32, i32, i32) {
    %c0_i32 = arith.constant 0 : i32
    %c0_i32_0 = arith.constant 0 : i32
    return %arg0, %c0_i32, %arg1 : i32, i32, i32
  }
  func.func @transform_7(%arg0: i32, %arg1: i32) -> (i32, i32, i32) {
    %c0_i32 = arith.constant 0 : i32
    %c0_i32_0 = arith.constant 0 : i32
    return %arg0, %arg1, %c0_i32 : i32, i32, i32
  }
}

</mosaic_0001>

<llo_original>
// kernel: tpu_custom_call.1
$region0: #{tpu_custom_call.1}
  #allocation0 [shape = 'u32[]', space=smem, size = 0x4, offset = 0x4, fixed_abs, tag = 'smem constant byte address 0x4 - core index']
  #allocation1 [shape = 'u32[144,128]{1,0:T(1,128)}', space=vmem, size = 0x12000, scoped, tag = 'internal scratch']
  #allocation2 [shape = 'f32[8,256]{1,0:T(8,128)}', space=vmem, size = 0x2000, scoped, tag = 'scratch operand']
  #allocation3 [shape = 'bf16[32,256]{1,0:T(16,128)(2,1)}', space=vmem, size = 0x4000, scoped, tag = 'scratch operand']
  #allocation4 [shape = 'f32[1,1]{1,0:T(1,128)S(6)}', space=smem, size = 0x200, scoped, tag = 'scoped memory for tpu_custom_call.1']
  %s0 = inlined_call_operand.hbm [shape: f32[2,32,256], index: 0, kind: input, shape index: {}]
  %s1 = inlined_call_operand.vmem [shape: f32[8,32], index: 1, kind: input, shape index: {}]
  %s2 = inlined_call_operand.vmem [shape: f32[8,1], index: 2, kind: input, shape index: {}]
  %s3 = inlined_call_operand.vmem [shape: f32[40,32], index: 3, kind: input, shape index: {}]
  %s4 = inlined_call_operand.vmem [shape: f32[40,1], index: 4, kind: input, shape index: {}]
  %s5 = inlined_call_operand.<no memory space> [shape: f32[1,1], index: 5, kind: input, shape index: {}]
  %s6 = inlined_call_operand.hbm [shape: f32[2,32,256], index: 6, kind: output, shape index: {0}]
  %s7 = inlined_call_operand.hbm [shape: f32[2,256,256], index: 7, kind: output, shape index: {1}]
  %8 = xla_tuple %s6, %s7
  %s9 = sld [smem:[#allocation0]]
  $region80: #{tpu_custom_call.1} parent=0
    _
  %s11 = ssub.s32 1, %s9
  %s12 = scalar_select 0, %s11, %s9
  %13 = sst [smem:[#allocation4]] %s5
  $region1: #{tpu_custom_call.1} parent=0
    #allocation5 [shape = 'u8[65536]{0}', space=vmem, size = 0x10000, scoped, tag = 'input window, operand 0']
    #allocation6 [shape = 's32[2]{0}', space=sflag, size = 0x8, scoped, tag = 'scoped memory for tpu_custom_call.1']
    #allocation7 [shape = 's32[2]{0}', space=sflag, size = 0x8, scoped, tag = 'scoped memory for tpu_custom_call.1']
    #allocation8 [shape = 'u8[32768]{0}', space=vmem, size = 0x8000, scoped, tag = 'output window, operand 0']
    #allocation9 [shape = 'u8[262144]{0}', space=vmem, size = 0x40000, scoped, tag = 'output window, operand 1']
    #allocation10 [shape = 's32[2]{0}', space=sflag, size = 0x8, scoped, tag = 'scoped memory for tpu_custom_call.1']
    %14 = vsyncpa [#allocation6], 0
    %s15 = scalar_lea.sflag [#allocation6], 1
    %16 = vsyncpa %s15, 0
    %17 = vsyncpa [#allocation7], 0
    %s18 = scalar_lea.sflag [#allocation7], 1
    %19 = vsyncpa %s18, 0
    %20 = vsyncpa [#allocation10], 0
    %s21 = scalar_lea.sflag [#allocation10], 1
    %22 = vsyncpa %s21, 0
    loop: start=0, step=1, limit=6
    $region2: #{tpu_custom_call.1} parent=1 // loop_pre_header
      _
    $region3: #{tpu_custom_call.1} parent=1 // loop_header
      %s24 = sphi 0, %s28
      %p25 = scmp.ge.s32.totalorder %s24, 6
      %s31 = sphi 0, %s43
      %s32 = sphi 0, %s39
      %s33 = sphi 0, %s31
      %s34 = sphi 0, %s32
      %s35 = sphi 0, %s33
      %s36 = sphi 0, %s34
      %s46 = sphi 0, %s48
      %s49 = sphi 0, %s46
      %s50 = sphi 0, %s49
      %s66 = sphi 0, %s50
      %s70 = sphi 0, %s70
      %s72 = sphi 0, %s70
      %s73 = sphi 0, %s72
      %s87 = sphi 0, %s73
      %s91 = sphi 0, %s91
      %s93 = sphi 0, %s91
      %s94 = sphi 0, %s93
      %s108 = sphi 0, %s94
      %s112 = sphi 0, %s112
      %s114 = sphi 0, %s112
      %s115 = sphi 0, %s114
      %s129 = sphi 0, %s115
      %s133 = sphi 0, %s133
      %s135 = sphi 0, %s133
      %s136 = sphi 0, %s135
      %s150 = sphi 0, %s136
      %s154 = sphi 0, %s154
      %s156 = sphi 0, %s154
      %s157 = sphi 0, %s156
      %s171 = sphi 0, %s157
      %s179 = sphi 0, %s181
      %s182 = sphi 0, %s179
      %s183 = sphi 0, %s182
      %s199 = sphi 0, %s183
      %s207 = sphi 0, %s209
      %s210 = sphi 0, %s207
      %s211 = sphi 0, %s210
      %s227 = sphi 0, %s211
    $region4: #{tpu_custom_call.1} parent=1 // loop_header_branch
      %27 = sbr.rel (%p25) target = $region8
    $region5: #{tpu_custom_call.1} parent=1 // loop_body
      %s29 = ssub.s32 %s24, 1
      %s30 = ssub.s32 %s24, 2
      %s37 = sadd.s32 1, %s32
      %p38 = scmp.ge.s32.totalorder %s37, 2
      %s39 = scalar_select %p38, 0, %s37
      %s40 = sadd.s32 1, %s31
      %s41 = scalar_select %p38, %s40, %s31
      %p42 = scmp.ge.s32.totalorder %s41, 2
      %s43 = scalar_select %p42, 0, %s41
      %s44 = ssub.s32 %s31, %s43
      %p45 = scmp.eq.s32.totalorder %s44, 0
      %s47 = sadd.s32 %s46, 1
      %s48 = scalar_select %p45, %s46, %s47
      %p51 = pneg %p45
      %p52 = scmp.eq.s32.totalorder %s24, 3
      %p53 = por %p51, %p52
      %p54 = scmp.ne.s32.totalorder %s46, %s49
      %p55 = scmp.eq.s32.totalorder %s24, 0
      %p56 = por %p54, %p55
      %p57 = scmp.ne.s32.totalorder %s46, %s49
      %p58 = scmp.eq.s32.totalorder %s29, 3
      %p59 = por %p57, %p58
      %p60 = scmp.ne.s32.totalorder %s49, %s50
      %p61 = scmp.eq.s32.totalorder %s29, 0
      %p62 = por %p60, %p61
      %p63 = scmp.ne.s32.totalorder %s49, %s50
      %p64 = scmp.eq.s32.totalorder %s30, 3
      %p65 = por %p63, %p64
      %p67 = scmp.ne.s32.totalorder %s50, %s66
      %p68 = scmp.eq.s32.totalorder %s30, 0
      %p69 = por %p67, %p68
      %s71 = sadd.s32 %s70, 1
      %p74 = scmp.eq.s32.totalorder %s24, 3
      %p75 = scmp.ne.s32.totalorder %s70, %s72
      %p76 = scmp.eq.s32.totalorder %s24, 0
      %p77 = por %p75, %p76
      %p78 = scmp.ne.s32.totalorder %s70, %s72
      %p79 = scmp.eq.s32.totalorder %s29, 3
      %p80 = por %p78, %p79
      %p81 = scmp.ne.s32.totalorder %s72, %s73
      %p82 = scmp.eq.s32.totalorder %s29, 0
      %p83 = por %p81, %p82
      %p84 = scmp.ne.s32.totalorder %s72, %s73
      %p85 = scmp.eq.s32.totalorder %s30, 3
      %p86 = por %p84, %p85
      %p88 = scmp.ne.s32.totalorder %s73, %s87
      %p89 = scmp.eq.s32.totalorder %s30, 0
      %p90 = por %p88, %p89
      %s92 = sadd.s32 %s91, 1
      %p95 = scmp.eq.s32.totalorder %s24, 3
      %p96 = scmp.ne.s32.totalorder %s91, %s93
      %p97 = scmp.eq.s32.totalorder %s24, 0
      %p98 = por %p96, %p97
      %p99 = scmp.ne.s32.totalorder %s91, %s93
      %p100 = scmp.eq.s32.totalorder %s29, 3
      %p101 = por %p99, %p100
      %p102 = scmp.ne.s32.totalorder %s93, %s94
      %p103 = scmp.eq.s32.totalorder %s29, 0
      %p104 = por %p102, %p103
      %p105 = scmp.ne.s32.totalorder %s93, %s94
      %p106 = scmp.eq.s32.totalorder %s30, 3
      %p107 = por %p105, %p106
      %p109 = scmp.ne.s32.totalorder %s94, %s108
      %p110 = scmp.eq.s32.totalorder %s30, 0
      %p111 = por %p109, %p110
      %s113 = sadd.s32 %s112, 1
      %p116 = scmp.eq.s32.totalorder %s24, 3
      %p117 = scmp.ne.s32.totalorder %s112, %s114
      %p118 = scmp.eq.s32.totalorder %s24, 0
      %p119 = por %p117, %p118
      %p120 = scmp.ne.s32.totalorder %s112, %s114
      %p121 = scmp.eq.s32.totalorder %s29, 3
      %p122 = por %p120, %p121
      %p123 = scmp.ne.s32.totalorder %s114, %s115
      %p124 = scmp.eq.s32.totalorder %s29, 0
      %p125 = por %p123, %p124
      %p126 = scmp.ne.s32.totalorder %s114, %s115
      %p127 = scmp.eq.s32.totalorder %s30, 3
      %p128 = por %p126, %p127
      %p130 = scmp.ne.s32.totalorder %s115, %s129
      %p131 = scmp.eq.s32.totalorder %s30, 0
      %p132 = por %p130, %p131
      %s134 = sadd.s32 %s133, 1
      %p137 = scmp.eq.s32.totalorder %s24, 3
      %p138 = scmp.ne.s32.totalorder %s133, %s135
      %p139 = scmp.eq.s32.totalorder %s24, 0
      %p140 = por %p138, %p139
      %p141 = scmp.ne.s32.totalorder %s133, %s135
      %p142 = scmp.eq.s32.totalorder %s29, 3
      %p143 = por %p141, %p142
      %p144 = scmp.ne.s32.totalorder %s135, %s136
      %p145 = scmp.eq.s32.totalorder %s29, 0
      %p146 = por %p144, %p145
      %p147 = scmp.ne.s32.totalorder %s135, %s136
      %p148 = scmp.eq.s32.totalorder %s30, 3
      %p149 = por %p147, %p148
      %p151 = scmp.ne.s32.totalorder %s136, %s150
      %p152 = scmp.eq.s32.totalorder %s30, 0
      %p153 = por %p151, %p152
      %s155 = sadd.s32 %s154, 1
      %p158 = scmp.eq.s32.totalorder %s24, 3
      %p159 = scmp.ne.s32.totalorder %s154, %s156
      %p160 = scmp.eq.s32.totalorder %s24, 0
      %p161 = por %p159, %p160
      %p162 = scmp.ne.s32.totalorder %s154, %s156
      %p163 = scmp.eq.s32.totalorder %s29, 3
      %p164 = por %p162, %p163
      %p165 = scmp.ne.s32.totalorder %s156, %s157
      %p166 = scmp.eq.s32.totalorder %s29, 0
      %p167 = por %p165, %p166
      %p168 = scmp.ne.s32.totalorder %s156, %s157
      %p169 = scmp.eq.s32.totalorder %s30, 3
      %p170 = por %p168, %p169
      %p172 = scmp.ne.s32.totalorder %s157, %s171
      %p173 = scmp.eq.s32.totalorder %s30, 0
      %p174 = por %p172, %p173
      %s175 = ssub.s32 %s31, %s43
      %s176 = ssub.s32 %s32, %s39
      %s177 = sor.u32 %s175, %s176
      %p178 = scmp.eq.s32.totalorder %s177, 0
      %s180 = sadd.s32 %s179, 1
      %s181 = scalar_select %p178, %s179, %s180
      %p184 = pneg %p178
      %p185 = scmp.eq.s32.totalorder %s24, 3
      %p186 = por %p184, %p185
      %p187 = scmp.ne.s32.totalorder %s179, %s182
      %p188 = scmp.eq.s32.totalorder %s24, 0
      %p189 = por %p187, %p188
      %p190 = scmp.ne.s32.totalorder %s179, %s182
      %p191 = scmp.eq.s32.totalorder %s29, 3
      %p192 = por %p190, %p191
      %p193 = scmp.ne.s32.totalorder %s182, %s183
      %p194 = scmp.eq.s32.totalorder %s29, 0
      %p195 = por %p193, %p194
      %p196 = scmp.ne.s32.totalorder %s182, %s183
      %p197 = scmp.eq.s32.totalorder %s30, 3
      %p198 = por %p196, %p197
      %p200 = scmp.ne.s32.totalorder %s183, %s199
      %p201 = scmp.eq.s32.totalorder %s30, 0
      %p202 = por %p200, %p201
      %s203 = ssub.s32 %s31, %s43
      %s204 = ssub.s32 %s32, %s39
      %s205 = sor.u32 %s203, %s204
      %p206 = scmp.eq.s32.totalorder %s205, 0
      %s208 = sadd.s32 %s207, 1
      %s209 = scalar_select %p206, %s207, %s208
      %p212 = pneg %p206
      %p213 = scmp.eq.s32.totalorder %s24, 3
      %p214 = por %p212, %p213
      %p215 = scmp.ne.s32.totalorder %s207, %s210
      %p216 = scmp.eq.s32.totalorder %s24, 0
      %p217 = por %p215, %p216
      %p218 = scmp.ne.s32.totalorder %s207, %s210
      %p219 = scmp.eq.s32.totalorder %s29, 3
      %p220 = por %p218, %p219
      %p221 = scmp.ne.s32.totalorder %s210, %s211
      %p222 = scmp.eq.s32.totalorder %s29, 0
      %p223 = por %p221, %p222
      %p224 = scmp.ne.s32.totalorder %s210, %s211
      %p225 = scmp.eq.s32.totalorder %s30, 3
      %p226 = por %p224, %p225
      %p228 = scmp.ne.s32.totalorder %s211, %s227
      %p229 = scmp.eq.s32.totalorder %s30, 0
      %p230 = por %p228, %p229
      %p231 = scmp.le.s32.totalorder 1, %s24
      %p232 = scmp.lt.s32.totalorder %s24, 5
      %p233 = pnand %p231, %p232
      %p234 = pneg %p233
      // Predicated region
      $region9: #{tpu_custom_call.1} parent=5 // pred_check
        _
      $region10: #{tpu_custom_call.1} parent=5 // pred_check_branch
        %236 = sbr.rel (%p233) target = $region12
      $region11: #{tpu_custom_call.1} parent=5 // pred_region
        %s237 = ssub.s32 %s24, 1
        // Predicated region
        $region13: #{tpu_custom_call.1} parent=11 // pred_check
          %p238 = pneg %p83
        $region14: #{tpu_custom_call.1} parent=11 // pred_check_branch
          %240 = sbr.rel (%p238) target = $region16
        $region15: #{tpu_custom_call.1} parent=11 // pred_region
          _
        $region16: #{tpu_custom_call.1} parent=11 // pred_fallthru
          _
        // Predicated region
        $region17: #{tpu_custom_call.1} parent=11 // pred_check
          %p241 = pneg %p104
        $region18: #{tpu_custom_call.1} parent=11 // pred_check_branch
          %243 = sbr.rel (%p241) target = $region20
        $region19: #{tpu_custom_call.1} parent=11 // pred_region
          _
        $region20: #{tpu_custom_call.1} parent=11 // pred_fallthru
          _
        // Predicated region
        $region21: #{tpu_custom_call.1} parent=11 // pred_check
          %p244 = pneg %p125
        $region22: #{tpu_custom_call.1} parent=11 // pred_check_branch
          %246 = sbr.rel (%p244) target = $region24
        $region23: #{tpu_custom_call.1} parent=11 // pred_region
          _
        $region24: #{tpu_custom_call.1} parent=11 // pred_fallthru
          _
        // Predicated region
        $region25: #{tpu_custom_call.1} parent=11 // pred_check
          %p247 = pneg %p146
        $region26: #{tpu_custom_call.1} parent=11 // pred_check_branch
          %249 = sbr.rel (%p247) target = $region28
        $region27: #{tpu_custom_call.1} parent=11 // pred_region
          _
        $region28: #{tpu_custom_call.1} parent=11 // pred_fallthru
          _
        // Predicated region
        $region29: #{tpu_custom_call.1} parent=11 // pred_check
          %p250 = pneg %p167
        $region30: #{tpu_custom_call.1} parent=11 // pred_check_branch
          %252 = sbr.rel (%p250) target = $region32
        $region31: #{tpu_custom_call.1} parent=11 // pred_region
          _
        $region32: #{tpu_custom_call.1} parent=11 // pred_fallthru
          _
      $region12: #{tpu_custom_call.1} parent=5 // pred_fallthru
        _
      %p253 = scmp.lt.s32.totalorder %s24, 4
      // Predicated region
      $region33: #{tpu_custom_call.1} parent=5 // pred_check
        %p254 = pneg %p253
      $region34: #{tpu_custom_call.1} parent=5 // pred_check_branch
        %256 = sbr.rel (%p254) target = $region36
      $region35: #{tpu_custom_call.1} parent=5 // pred_region
        // Predicated region
        $region37: #{tpu_custom_call.1} parent=35 // pred_check
          %p257 = pneg %p56
        $region38: #{tpu_custom_call.1} parent=35 // pred_check_branch
          %259 = sbr.rel (%p257) target = $region40
        $region39: #{tpu_custom_call.1} parent=35 // pred_region
          %s260 = sand.u32 %s46, 1
          %s261 = scalar_lea.sflag [#allocation6], %s260
          %s262 = sand.u32 %s46, 1
          %s263 = smul.addr %s262, 64
          %s264 = scalar_lea.vmem [#allocation5], %s263
          %s266 = ssub.s32 1024, 1024
          %267 = vsyncadd %s261, %s266
          %s268 = smul.addr %s31, 8
          %s269 = smul.addr %s268, 128
          %s270 = scalar_lea.hbm %s0, %s269
          %s271 = sshll.u32 %s264, 4
          %s272 = int_to_ptr.vmem [resolvable:$true] %s271
          %277 = dma.hbm_to_vmem [thread:$0]  %s270, 1024, %s272, %s261, 256, 256, 16
        $region40: #{tpu_custom_call.1} parent=35 // pred_fallthru
          _
      $region36: #{tpu_custom_call.1} parent=5 // pred_fallthru
        _
      %p278 = scmp.le.s32.totalorder 1, %s24
      %p279 = scmp.lt.s32.totalorder %s24, 5
      %p280 = pnand %p278, %p279
      %p281 = pneg %p280
      // Predicated region
      $region41: #{tpu_custom_call.1} parent=5 // pred_check
        _
      $region42: #{tpu_custom_call.1} parent=5 // pred_check_branch
        %283 = sbr.rel (%p280) target = $region44
      $region43: #{tpu_custom_call.1} parent=5 // pred_region
        %s284 = ssub.s32 %s24, 1
        %s285 = sand.u32 %s49, 1
        %s286 = scalar_lea.sflag [#allocation6], %s285
        %s287 = sand.u32 %s49, 1
        %s288 = smul.addr %s287, 64
        %s289 = scalar_lea.vmem [#allocation5], %s288
        // Predicated region
        $region45: #{tpu_custom_call.1} parent=43 // pred_check
          %p290 = pneg %p62
        $region46: #{tpu_custom_call.1} parent=43 // pred_check_branch
          %292 = sbr.rel (%p290) target = $region48
        $region47: #{tpu_custom_call.1} parent=43 // pred_region
          %293 = dma.done %s286, 1024
        $region48: #{tpu_custom_call.1} parent=43 // pred_fallthru
          _
        %s294 = sand.u32 %s49, 1
        %s295 = scalar_lea.sflag [#allocation6], %s294
        %s296 = sand.u32 %s49, 1
        %s297 = smul.addr %s296, 64
        %s298 = scalar_lea.vmem [#allocation5], %s297
        %p299 = pneg %p62
        %p300 = pneg %p59
        %p301 = pneg %p83
        %p302 = pneg %p80
        %p303 = pneg %p104
        %p304 = pneg %p101
        %p305 = pneg %p125
        %p306 = pneg %p122
        %p307 = pneg %p146
        %p308 = pneg %p143
        %p309 = pneg %p167
        %p310 = pneg %p164
        %p311 = pneg %p195
        %p312 = pneg %p192
        %s313 = sand.u32 %s182, 1
        %s314 = scalar_lea.sflag [#allocation7], %s313
        %s315 = sand.u32 %s182, 1
        %s316 = smul.addr %s315, 32
        %s317 = scalar_lea.vmem [#allocation8], %s316
        %p318 = pneg %p223
        %p319 = pneg %p220
        %s320 = sand.u32 %s210, 1
        %s321 = scalar_lea.sflag [#allocation10], %s320
        %s322 = sand.u32 %s210, 1
        %s323 = smul.addr %s322, 256
        %s324 = scalar_lea.vmem [#allocation9], %s323
        %s325 = smul.u32 16, %s34
        %p327 = scmp.eq.s32.totalorder %s34, 0
        // Predicated region
        $region49: #{tpu_custom_call.1} parent=43 // pred_check
          %p328 = pneg %p327
        $region50: #{tpu_custom_call.1} parent=43 // pred_check_branch
          %330 = sbr.rel (%p328) target = $region52
        $region51: #{tpu_custom_call.1} parent=43 // pred_region
          loop: start=0, step=1, limit=2
          $region53: #{tpu_custom_call.1} parent=51 // loop_pre_header
            _
          $region54: #{tpu_custom_call.1} parent=51 // loop_header
            %s332 = sphi 0, %s336
            %p333 = scmp.ge.s32.totalorder %s332, 2
          $region55: #{tpu_custom_call.1} parent=51 // loop_header_branch
            %335 = sbr.rel (%p333) target = $region59
          $region56: #{tpu_custom_call.1} parent=51 // loop_body
            %s337 = smul.u32 %s332, 128
            %s338 = sshra.s32 %s337, 7
            %s339 = sand.u32 %s337, 127
            %s340 = smul.addr %s338, 8
            %s341 = scalar_lea.vmem %s289, %s340 [#allocation5]
            %v342 = vld [vmem:[%s341] sm:$0xff]
            %v343 = vld [vmem:[%s341 + $0x10] sm:$0xff]
            %v344 = vld [vmem:[%s341 + $0x20] sm:$0xff]
            %v345 = vld [vmem:[%s341 + $0x30] sm:$0xff]
            %v346 = vld [vmem:[%s3] sm:$0xff]
            %v347 = vld [vmem:[%s3 + $0x8] sm:$0xff]
            %v348 = vld [vmem:[%s3 + $0x10] sm:$0xff]
            %v349 = vld [vmem:[%s3 + $0x18] sm:$0xff]
            %v350 = vld [vmem:[%s3 + $0x20] sm:$0xff]
            %v351 = vld [vmem:[%s4] sm:$0xff]
            %v352 = vld [vmem:[%s4 + $0x8] sm:$0xff]
            %v353 = vld [vmem:[%s4 + $0x10] sm:$0xff]
            %v354 = vld [vmem:[%s4 + $0x18] sm:$0xff]
            %v355 = vld [vmem:[%s4 + $0x20] sm:$0xff]
            %357 = vset.pattern.permute.xlu0 0
            %358 = vperm.xlu0 %357, %v351
            %v359 = vpop.permute.xlu0 %358
            %362 = vset.pattern.permute.xlu0 0
            %363 = vperm.xlu0 %362, %v352
            %v364 = vpop.permute.xlu0 %363
            %367 = vset.pattern.permute.xlu0 0
            %368 = vperm.xlu0 %367, %v353
            %v369 = vpop.permute.xlu0 %368
            %372 = vset.pattern.permute.xlu0 0
            %373 = vperm.xlu0 %372, %v354
            %v374 = vpop.permute.xlu0 %373
            %377 = vset.pattern.permute.xlu0 0
            %378 = vperm.xlu0 %377, %v355
            %v379 = vpop.permute.xlu0 %378
            %vm381 = vcmask 261120
            %v383 = vsel %vm381, %v346, 0
            %v386 = vsel %vm381, %v347, 0
            %v389 = vsel %vm381, %v348, 0
            %v392 = vsel %vm381, %v349, 0
            %v395 = vsel %vm381, %v350, 0
            %397 = vmatprep.subr.mxu0 0.0
            %398 = vmatpush1.msra.mxu0 %v342
            %399 = vmatprep.subr.mxu0 0.0
            %400 = vmatpush1.msra.mxu0 %v343
            %401 = vmatprep.subr.mxu0 0.0
            %402 = vmatpush1.msra.mxu0 %v344
            %403 = vmatprep.subr.mxu0 0.0
            %404 = vmatpush1.msra.mxu0 %v345
            %405 = vmatprep.subr.mxu0 0.0
            %406 = vmatpush1.msra.mxu0 0.0
            %407 = vmatprep.subr.mxu0 0.0
            %408 = vmatpush1.msra.mxu0 0.0
            %409 = vmatprep.subr.mxu0 0.0
            %410 = vmatpush1.msra.mxu0 0.0
            %411 = vmatprep.subr.mxu0 0.0
            %412 = vmatpush1.msra.mxu0 0.0
            %413 = vmatprep.subr.mxu0 0.0
            %414 = vmatpush1.msra.mxu0 0.0
            %415 = vmatprep.subr.mxu0 0.0
            %416 = vmatpush1.msra.mxu0 0.0
            %417 = vmatprep.subr.mxu0 0.0
            %418 = vmatpush1.msra.mxu0 0.0
            %419 = vmatprep.subr.mxu0 0.0
            %420 = vmatpush1.msra.mxu0 0.0
            %421 = vmatprep.subr.mxu0 0.0
            %422 = vmatpush1.msra.mxu0 0.0
            %423 = vmatprep.subr.mxu0 0.0
            %424 = vmatpush1.msra.mxu0 0.0
            %425 = vmatprep.subr.mxu0 0.0
            %426 = vmatpush1.msra.mxu0 0.0
            %427 = vmatprep.subr.mxu0 0.0
            %428 = vmatpush1.msra.mxu0 0.0
            %429 = vmatprep.subr.mxu0 0.0
            %430 = vmatpush1.msra.mxu0 0.0
            %431 = vmatprep.subr.mxu0 0.0
            %432 = vmatpush1.msra.mxu0 0.0
            %433 = vmatprep.subr.mxu0 0.0
            %434 = vmatpush1.msra.mxu0 0.0
            %435 = vmatprep.subr.mxu0 0.0
            %436 = vmatpush1.msra.mxu0 0.0
            %437 = vmatprep.subr.mxu0 0.0
            %438 = vmatpush1.msra.mxu0 0.0
            %439 = vmatprep.subr.mxu0 0.0
            %440 = vmatpush1.msra.mxu0 0.0
            %441 = vmatprep.subr.mxu0 0.0
            %442 = vmatpush1.msra.mxu0 0.0
            %443 = vmatprep.subr.mxu0 0.0
            %444 = vmatpush1.msra.mxu0 0.0
            %445 = vmatprep.subr.mxu0 0.0
            %446 = vmatpush1.msra.mxu0 0.0
            %447 = vmatprep.subr.mxu0 0.0
            %448 = vmatpush1.msra.mxu0 0.0
            %449 = vmatprep.subr.mxu0 0.0
            %450 = vmatpush1.msra.mxu0 0.0
            %451 = vmatprep.subr.mxu0 0.0
            %452 = vmatpush1.msra.mxu0 0.0
            %453 = vmatprep.subr.mxu0 0.0
            %454 = vmatpush1.msra.mxu0 0.0
            %455 = vmatprep.subr.mxu0 0.0
            %456 = vmatpush1.msra.mxu0 0.0
            %457 = vmatprep.subr.mxu0 0.0
            %458 = vmatpush1.msra.mxu0 0.0
            %459 = vmatprep.subr.mxu0 0.0
            %460 = vmatpush1.msra.mxu0 0.0
            %461 = vmatprep.mubr.f32.mxu0 0.0
            %462 = vmatmul.mubr.f32.gmra.mrb[0].mxu0 %v383
            %v463 = vpop.f32.mrb[0].mxu0
            %v464 = vadd.f32 %v359, %v463
            %v465 = vpop.f32.mrb[0].mxu0
            %466 = vmatprep.mubr.f32.mxu0 0.0
            %467 = vmatmul.mubr.f32.gmra.mrb[0].mxu0 %v386
            %v468 = vpop.f32.mrb[0].mxu0
            %v469 = vadd.f32 %v364, %v468
            %v470 = vpop.f32.mrb[0].mxu0
            %471 = vmatprep.mubr.f32.mxu0 0.0
            %472 = vmatmul.mubr.f32.gmra.mrb[0].mxu0 %v389
            %v473 = vpop.f32.mrb[0].mxu0
            %v474 = vadd.f32 %v369, %v473
            %v475 = vpop.f32.mrb[0].mxu0
            %476 = vmatprep.mubr.f32.mxu0 0.0
            %477 = vmatmul.mubr.f32.gmra.mrb[0].mxu0 %v392
            %v478 = vpop.f32.mrb[0].mxu0
            %v479 = vadd.f32 %v374, %v478
            %v480 = vpop.f32.mrb[0].mxu0
            %481 = vmatprep.mubr.f32.mxu0 0.0
            %482 = vmatmul.mubr.f32.gmra.mrb[0].mxu0 %v395
            %v483 = vpop.f32.mrb[0].mxu0
            %v484 = vadd.f32 %v379, %v483
            %v485 = vpop.f32.mrb[0].mxu0
            %486 = vdwg.mxu0
            %s487 = smul.addr %s338, 8
            %s488 = scalar_lea.vmem [#allocation2], %s487
            %489 = vst [vmem:[%s488] sm:$0xff] %v464
            %v490 = vpack.c.bf16 %v474, %v469
            %v491 = vpack.c.bf16 %v484, %v479
            %s492 = smul.addr %s338, 8
            %s493 = scalar_lea.vmem [#allocation3], %s492
            %494 = vst [vmem:[%s493] sm:$0xff] %v490
            %495 = vst [vmem:[%s493 + $0x10] sm:$0xff] %v491
          $region57: #{tpu_custom_call.1} parent=51 // loop_footer
            %s336 = sadd.s32 1, %s332
          $region58: #{tpu_custom_call.1} parent=51 // loop_footer_branch
            %331 = sbr.rel target = $region54
          $region59: #{tpu_custom_call.1} parent=51 // loop_exit
            _
        $region52: #{tpu_custom_call.1} parent=43 // pred_fallthru
          _
        %s496 = smul.u32 %s34, 128
        %s497 = sshra.s32 %s496, 7
        %s498 = sand.u32 %s496, 127
        %s499 = smul.addr %s497, 8
        %s500 = scalar_lea.vmem %s289, %s499 [#allocation5]
        %v501 = vld [vmem:[%s500] sm:$0xff]
        %v502 = vld [vmem:[%s500 + $0x10] sm:$0xff]
        %v503 = vld [vmem:[%s500 + $0x20] sm:$0xff]
        %v504 = vld [vmem:[%s500 + $0x30] sm:$0xff]
        %v505 = vld [vmem:[%s1] sm:$0xff]
        %v506 = vld [vmem:[%s2] sm:$0xff]
        %508 = vset.pattern.permute.xlu0 0
        %509 = vperm.xlu0 %508, %v506
        %v510 = vpop.permute.xlu0 %509
        %vm512 = vcmask 261120
        %v514 = vsel %vm512, %v505, 0
        %516 = vmatprep.subr.mxu0 0.0
        %517 = vmatpush1.msra.mxu0 %v501
        %518 = vmatprep.subr.mxu0 0.0
        %519 = vmatpush1.msra.mxu0 %v502
        %520 = vmatprep.subr.mxu0 0.0
        %521 = vmatpush1.msra.mxu0 %v503
        %522 = vmatprep.subr.mxu0 0.0
        %523 = vmatpush1.msra.mxu0 %v504
        %524 = vmatprep.subr.mxu0 0.0
        %525 = vmatpush1.msra.mxu0 0.0
        %526 = vmatprep.subr.mxu0 0.0
        %527 = vmatpush1.msra.mxu0 0.0
        %528 = vmatprep.subr.mxu0 0.0
        %529 = vmatpush1.msra.mxu0 0.0
        %530 = vmatprep.subr.mxu0 0.0
        %531 = vmatpush1.msra.mxu0 0.0
        %532 = vmatprep.subr.mxu0 0.0
        %533 = vmatpush1.msra.mxu0 0.0
        %534 = vmatprep.subr.mxu0 0.0
        %535 = vmatpush1.msra.mxu0 0.0
        %536 = vmatprep.subr.mxu0 0.0
        %537 = vmatpush1.msra.mxu0 0.0
        %538 = vmatprep.subr.mxu0 0.0
        %539 = vmatpush1.msra.mxu0 0.0
        %540 = vmatprep.subr.mxu0 0.0
        %541 = vmatpush1.msra.mxu0 0.0
        %542 = vmatprep.subr.mxu0 0.0
        %543 = vmatpush1.msra.mxu0 0.0
        %544 = vmatprep.subr.mxu0 0.0
        %545 = vmatpush1.msra.mxu0 0.0
        %546 = vmatprep.subr.mxu0 0.0
        %547 = vmatpush1.msra.mxu0 0.0
        %548 = vmatprep.subr.mxu0 0.0
        %549 = vmatpush1.msra.mxu0 0.0
        %550 = vmatprep.subr.mxu0 0.0
        %551 = vmatpush1.msra.mxu0 0.0
        %552 = vmatprep.subr.mxu0 0.0
        %553 = vmatpush1.msra.mxu0 0.0
        %554 = vmatprep.subr.mxu0 0.0
        %555 = vmatpush1.msra.mxu0 0.0
        %556 = vmatprep.subr.mxu0 0.0
        %557 = vmatpush1.msra.mxu0 0.0
        %558 = vmatprep.subr.mxu0 0.0
        %559 = vmatpush1.msra.mxu0 0.0
        %560 = vmatprep.subr.mxu0 0.0
        %561 = vmatpush1.msra.mxu0 0.0
        %562 = vmatprep.subr.mxu0 0.0
        %563 = vmatpush1.msra.mxu0 0.0
        %564 = vmatprep.subr.mxu0 0.0
        %565 = vmatpush1.msra.mxu0 0.0
        %566 = vmatprep.subr.mxu0 0.0
        %567 = vmatpush1.msra.mxu0 0.0
        %568 = vmatprep.subr.mxu0 0.0
        %569 = vmatpush1.msra.mxu0 0.0
        %570 = vmatprep.subr.mxu0 0.0
        %571 = vmatpush1.msra.mxu0 0.0
        %572 = vmatprep.subr.mxu0 0.0
        %573 = vmatpush1.msra.mxu0 0.0
        %574 = vmatprep.subr.mxu0 0.0
        %575 = vmatpush1.msra.mxu0 0.0
        %576 = vmatprep.subr.mxu0 0.0
        %577 = vmatpush1.msra.mxu0 0.0
        %578 = vmatprep.subr.mxu0 0.0
        %579 = vmatpush1.msra.mxu0 0.0
        %580 = vmatprep.mubr.f32.mxu0 0.0
        %581 = vmatmul.mubr.f32.gmra.mrb[0].mxu0 %v514
        %v582 = vpop.f32.mrb[0].mxu0
        %v583 = vadd.f32 %v510, %v582
        %v584 = vpop.f32.mrb[0].mxu0
        %585 = vdwg.mxu0
        %v586 = vld [vmem:[#allocation2] sm:$0xff]
        %v587 = vld [vmem:[#allocation2 + $0x8] sm:$0xff]
        %588 = vxpose.xlu0.b32.start [1/16] %v586, 128
        %589 = vxpose.xlu0.b32.cont [2/16] 0.0, 128
        %590 = vxpose.xlu0.b32.cont [3/16] 0.0, 128
        %591 = vxpose.xlu0.b32.cont [4/16] 0.0, 128
        %592 = vxpose.xlu0.b32.cont [5/16] 0.0, 128
        %593 = vxpose.xlu0.b32.cont [6/16] 0.0, 128
        %594 = vxpose.xlu0.b32.cont [7/16] 0.0, 128
        %595 = vxpose.xlu0.b32.cont [8/16] 0.0, 128
        %596 = vxpose.xlu0.b32.cont [9/16] 0.0, 128
        %597 = vxpose.xlu0.b32.cont [10/16] 0.0, 128
        %598 = vxpose.xlu0.b32.cont [11/16] 0.0, 128
        %599 = vxpose.xlu0.b32.cont [12/16] 0.0, 128
        %600 = vxpose.xlu0.b32.cont [13/16] 0.0, 128
        %601 = vxpose.xlu0.b32.cont [14/16] 0.0, 128
        %602 = vxpose.xlu0.b32.cont [15/16] 0.0, 128
        %603 = vxpose.xlu0.b32.end [16/16] 0.0, 128
        %v604 = vpop.trf.xlu0
        %v605 = vpop.trf.xlu0
        %v606 = vpop.trf.xlu0
        %v607 = vpop.trf.xlu0
        %v608 = vpop.trf.xlu0
        %v609 = vpop.trf.xlu0
        %v610 = vpop.trf.xlu0
        %v611 = vpop.trf.xlu0
        %v612 = vpop.trf.xlu0
        %v613 = vpop.trf.xlu0
        %v614 = vpop.trf.xlu0
        %v615 = vpop.trf.xlu0
        %v616 = vpop.trf.xlu0
        %v617 = vpop.trf.xlu0
        %v618 = vpop.trf.xlu0
        %v619 = vpop.trf.xlu0
        %620 = vxpose.xlu0.b32.start [1/16] %v587, 128
        %621 = vxpose.xlu0.b32.cont [2/16] 0.0, 128
        %622 = vxpose.xlu0.b32.cont [3/16] 0.0, 128
        %623 = vxpose.xlu0.b32.cont [4/16] 0.0, 128
        %624 = vxpose.xlu0.b32.cont [5/16] 0.0, 128
        %625 = vxpose.xlu0.b32.cont [6/16] 0.0, 128
        %626 = vxpose.xlu0.b32.cont [7/16] 0.0, 128
        %627 = vxpose.xlu0.b32.cont [8/16] 0.0, 128
        %628 = vxpose.xlu0.b32.cont [9/16] 0.0, 128
        %629 = vxpose.xlu0.b32.cont [10/16] 0.0, 128
        %630 = vxpose.xlu0.b32.cont [11/16] 0.0, 128
        %631 = vxpose.xlu0.b32.cont [12/16] 0.0, 128
        %632 = vxpose.xlu0.b32.cont [13/16] 0.0, 128
        %633 = vxpose.xlu0.b32.cont [14/16] 0.0, 128
        %634 = vxpose.xlu0.b32.cont [15/16] 0.0, 128
        %635 = vxpose.xlu0.b32.end [16/16] 0.0, 128
        %v636 = vpop.trf.xlu0
        %v637 = vpop.trf.xlu0
        %v638 = vpop.trf.xlu0
        %v639 = vpop.trf.xlu0
        %v640 = vpop.trf.xlu0
        %v641 = vpop.trf.xlu0
        %v642 = vpop.trf.xlu0
        %v643 = vpop.trf.xlu0
        %v644 = vpop.trf.xlu0
        %v645 = vpop.trf.xlu0
        %v646 = vpop.trf.xlu0
        %v647 = vpop.trf.xlu0
        %v648 = vpop.trf.xlu0
        %v649 = vpop.trf.xlu0
        %v650 = vpop.trf.xlu0
        %v651 = vpop.trf.xlu0
        %vm652 = vcmask 64512
        %v654 = vsel %vm652, %v604, 0
        %v657 = vsel %vm652, %v605, 0
        %v660 = vsel %vm652, %v606, 0
        %v663 = vsel %vm652, %v607, 0
        %v666 = vsel %vm652, %v608, 0
        %v669 = vsel %vm652, %v609, 0
        %v672 = vsel %vm652, %v610, 0
        %v675 = vsel %vm652, %v611, 0
        %v678 = vsel %vm652, %v612, 0
        %v681 = vsel %vm652, %v613, 0
        %v684 = vsel %vm652, %v614, 0
        %v687 = vsel %vm652, %v615, 0
        %v690 = vsel %vm652, %v616, 0
        %v693 = vsel %vm652, %v617, 0
        %v696 = vsel %vm652, %v618, 0
        %v699 = vsel %vm652, %v619, 0
        %v702 = vsel %vm652, %v636, 0
        %v705 = vsel %vm652, %v637, 0
        %v708 = vsel %vm652, %v638, 0
        %v711 = vsel %vm652, %v639, 0
        %v714 = vsel %vm652, %v640, 0
        %v717 = vsel %vm652, %v641, 0
        %v720 = vsel %vm652, %v642, 0
        %v723 = vsel %vm652, %v643, 0
        %v726 = vsel %vm652, %v644, 0
        %v729 = vsel %vm652, %v645, 0
        %v732 = vsel %vm652, %v646, 0
        %v735 = vsel %vm652, %v647, 0
        %v738 = vsel %vm652, %v648, 0
        %v741 = vsel %vm652, %v649, 0
        %v744 = vsel %vm652, %v650, 0
        %v747 = vsel %vm652, %v651, 0
        %749 = vmatprep.subr.mxu0 0.0
        %750 = vmatpush1.msra.mxu0 %v583
        %751 = vmatprep.subr.mxu0 0.0
        %752 = vmatpush1.msra.mxu0 0.0
        %753 = vmatprep.subr.mxu0 0.0
        %754 = vmatpush1.msra.mxu0 0.0
        %755 = vmatprep.subr.mxu0 0.0
        %756 = vmatpush1.msra.mxu0 0.0
        %757 = vmatprep.subr.mxu0 0.0
        %758 = vmatpush1.msra.mxu0 0.0
        %759 = vmatprep.subr.mxu0 0.0
        %760 = vmatpush1.msra.mxu0 0.0
        %761 = vmatprep.subr.mxu0 0.0
        %762 = vmatpush1.msra.mxu0 0.0
        %763 = vmatprep.subr.mxu0 0.0
        %764 = vmatpush1.msra.mxu0 0.0
        %765 = vmatprep.subr.mxu0 0.0
        %766 = vmatpush1.msra.mxu0 0.0
        %767 = vmatprep.subr.mxu0 0.0
        %768 = vmatpush1.msra.mxu0 0.0
        %769 = vmatprep.subr.mxu0 0.0
        %770 = vmatpush1.msra.mxu0 0.0
        %771 = vmatprep.subr.mxu0 0.0
        %772 = vmatpush1.msra.mxu0 0.0
        %773 = vmatprep.subr.mxu0 0.0
        %774 = vmatpush1.msra.mxu0 0.0
        %775 = vmatprep.subr.mxu0 0.0
        %776 = vmatpush1.msra.mxu0 0.0
        %777 = vmatprep.subr.mxu0 0.0
        %778 = vmatpush1.msra.mxu0 0.0
        %779 = vmatprep.subr.mxu0 0.0
        %780 = vmatpush1.msra.mxu0 0.0
        %781 = vmatprep.subr.mxu0 0.0
        %782 = vmatpush1.msra.mxu0 0.0
        %783 = vmatprep.subr.mxu0 0.0
        %784 = vmatpush1.msra.mxu0 0.0
        %785 = vmatprep.subr.mxu0 0.0
        %786 = vmatpush1.msra.mxu0 0.0
        %787 = vmatprep.subr.mxu0 0.0
        %788 = vmatpush1.msra.mxu0 0.0
        %789 = vmatprep.subr.mxu0 0.0
        %790 = vmatpush1.msra.mxu0 0.0
        %791 = vmatprep.subr.mxu0 0.0
        %792 = vmatpush1.msra.mxu0 0.0
        %793 = vmatprep.subr.mxu0 0.0
        %794 = vmatpush1.msra.mxu0 0.0
        %795 = vmatprep.subr.mxu0 0.0
        %796 = vmatpush1.msra.mxu0 0.0
        %797 = vmatprep.subr.mxu0 0.0
        %798 = vmatpush1.msra.mxu0 0.0
        %799 = vmatprep.subr.mxu0 0.0
        %800 = vmatpush1.msra.mxu0 0.0
        %801 = vmatprep.subr.mxu0 0.0
        %802 = vmatpush1.msra.mxu0 0.0
        %803 = vmatprep.subr.mxu0 0.0
        %804 = vmatpush1.msra.mxu0 0.0
        %805 = vmatprep.subr.mxu0 0.0
        %806 = vmatpush1.msra.mxu0 0.0
        %807 = vmatprep.subr.mxu0 0.0
        %808 = vmatpush1.msra.mxu0 0.0
        %809 = vmatprep.subr.mxu0 0.0
        %810 = vmatpush1.msra.mxu0 0.0
        %811 = vmatprep.subr.mxu0 0.0
        %812 = vmatpush1.msra.mxu0 0.0
        %813 = vmatprep.mubr.f32.mxu0 0.0
        %814 = vmatmul.mubr.f32.gmra.mrb[0].mxu0 %v654
        %v815 = vpop.f32.mrb[0].mxu0
        %v816 = vadd.f32 0.0, %v815
        %v817 = vpop.f32.mrb[0].mxu0
        %818 = vmatprep.mubr.f32.mxu0 0.0
        %819 = vmatmul.mubr.f32.gmra.mrb[0].mxu0 %v657
        %v820 = vpop.f32.mrb[0].mxu0
        %v821 = vadd.f32 0.0, %v820
        %v822 = vpop.f32.mrb[0].mxu0
        %823 = vmatprep.mubr.f32.mxu0 0.0
        %824 = vmatmul.mubr.f32.gmra.mrb[0].mxu0 %v660
        %v825 = vpop.f32.mrb[0].mxu0
        %v826 = vadd.f32 0.0, %v825
        %v827 = vpop.f32.mrb[0].mxu0
        %828 = vmatprep.mubr.f32.mxu0 0.0
        %829 = vmatmul.mubr.f32.gmra.mrb[0].mxu0 %v663
        %v830 = vpop.f32.mrb[0].mxu0
        %v831 = vadd.f32 0.0, %v830
        %v832 = vpop.f32.mrb[0].mxu0
        %833 = vmatprep.mubr.f32.mxu0 0.0
        %834 = vmatmul.mubr.f32.gmra.mrb[0].mxu0 %v666
        %v835 = vpop.f32.mrb[0].mxu0
        %v836 = vadd.f32 0.0, %v835
        %v837 = vpop.f32.mrb[0].mxu0
        %838 = vmatprep.mubr.f32.mxu0 0.0
        %839 = vmatmul.mubr.f32.gmra.mrb[0].mxu0 %v669
        %v840 = vpop.f32.mrb[0].mxu0
        %v841 = vadd.f32 0.0, %v840
        %v842 = vpop.f32.mrb[0].mxu0
        %843 = vmatprep.mubr.f32.mxu0 0.0
        %844 = vmatmul.mubr.f32.gmra.mrb[0].mxu0 %v672
        %v845 = vpop.f32.mrb[0].mxu0
        %v846 = vadd.f32 0.0, %v845
        %v847 = vpop.f32.mrb[0].mxu0
        %848 = vmatprep.mubr.f32.mxu0 0.0
        %849 = vmatmul.mubr.f32.gmra.mrb[0].mxu0 %v675
        %v850 = vpop.f32.mrb[0].mxu0
        %v851 = vadd.f32 0.0, %v850
        %v852 = vpop.f32.mrb[0].mxu0
        %853 = vmatprep.mubr.f32.mxu0 0.0
        %854 = vmatmul.mubr.f32.gmra.mrb[0].mxu0 %v678
        %v855 = vpop.f32.mrb[0].mxu0
        %v856 = vadd.f32 0.0, %v855
        %v857 = vpop.f32.mrb[0].mxu0
        %858 = vmatprep.mubr.f32.mxu0 0.0
        %859 = vmatmul.mubr.f32.gmra.mrb[0].mxu0 %v681
        %v860 = vpop.f32.mrb[0].mxu0
        %v861 = vadd.f32 0.0, %v860
        %v862 = vpop.f32.mrb[0].mxu0
        %863 = vmatprep.mubr.f32.mxu0 0.0
        %864 = vmatmul.mubr.f32.gmra.mrb[0].mxu0 %v684
        %v865 = vpop.f32.mrb[0].mxu0
        %v866 = vadd.f32 0.0, %v865
        %v867 = vpop.f32.mrb[0].mxu0
        %868 = vmatprep.mubr.f32.mxu0 0.0
        %869 = vmatmul.mubr.f32.gmra.mrb[0].mxu0 %v687
        %v870 = vpop.f32.mrb[0].mxu0
        %v871 = vadd.f32 0.0, %v870
        %v872 = vpop.f32.mrb[0].mxu0
        %873 = vmatprep.mubr.f32.mxu0 0.0
        %874 = vmatmul.mubr.f32.gmra.mrb[0].mxu0 %v690
        %v875 = vpop.f32.mrb[0].mxu0
        %v876 = vadd.f32 0.0, %v875
        %v877 = vpop.f32.mrb[0].mxu0
        %878 = vmatprep.mubr.f32.mxu0 0.0
        %879 = vmatmul.mubr.f32.gmra.mrb[0].mxu0 %v693
        %v880 = vpop.f32.mrb[0].mxu0
        %v881 = vadd.f32 0.0, %v880
        %v882 = vpop.f32.mrb[0].mxu0
        %883 = vmatprep.mubr.f32.mxu0 0.0
        %884 = vmatmul.mubr.f32.gmra.mrb[0].mxu0 %v696
        %v885 = vpop.f32.mrb[0].mxu0
        %v886 = vadd.f32 0.0, %v885
        %v887 = vpop.f32.mrb[0].mxu0
        %888 = vmatprep.mubr.f32.mxu0 0.0
        %889 = vmatmul.mubr.f32.gmra.mrb[0].mxu0 %v699
        %v890 = vpop.f32.mrb[0].mxu0
        %v891 = vadd.f32 0.0, %v890
        %v892 = vpop.f32.mrb[0].mxu0
        %893 = vmatprep.mubr.f32.mxu0 0.0
        %894 = vmatmul.mubr.f32.gmra.mrb[0].mxu0 %v702
        %v895 = vpop.f32.mrb[0].mxu0
        %v896 = vadd.f32 0.0, %v895
        %v897 = vpop.f32.mrb[0].mxu0
        %898 = vmatprep.mubr.f32.mxu0 0.0
        %899 = vmatmul.mubr.f32.gmra.mrb[0].mxu0 %v705
        %v900 = vpop.f32.mrb[0].mxu0
        %v901 = vadd.f32 0.0, %v900
        %v902 = vpop.f32.mrb[0].mxu0
        %903 = vmatprep.mubr.f32.mxu0 0.0
        %904 = vmatmul.mubr.f32.gmra.mrb[0].mxu0 %v708
        %v905 = vpop.f32.mrb[0].mxu0
        %v906 = vadd.f32 0.0, %v905
        %v907 = vpop.f32.mrb[0].mxu0
        %908 = vmatprep.mubr.f32.mxu0 0.0
        %909 = vmatmul.mubr.f32.gmra.mrb[0].mxu0 %v711
        %v910 = vpop.f32.mrb[0].mxu0
        %v911 = vadd.f32 0.0, %v910
        %v912 = vpop.f32.mrb[0].mxu0
        %913 = vmatprep.mubr.f32.mxu0 0.0
        %914 = vmatmul.mubr.f32.gmra.mrb[0].mxu0 %v714
        %v915 = vpop.f32.mrb[0].mxu0
        %v916 = vadd.f32 0.0, %v915
        %v917 = vpop.f32.mrb[0].mxu0
        %918 = vmatprep.mubr.f32.mxu0 0.0
        %919 = vmatmul.mubr.f32.gmra.mrb[0].mxu0 %v717
        %v920 = vpop.f32.mrb[0].mxu0
        %v921 = vadd.f32 0.0, %v920
        %v922 = vpop.f32.mrb[0].mxu0
        %923 = vmatprep.mubr.f32.mxu0 0.0
        %924 = vmatmul.mubr.f32.gmra.mrb[0].mxu0 %v720
        %v925 = vpop.f32.mrb[0].mxu0
        %v926 = vadd.f32 0.0, %v925
        %v927 = vpop.f32.mrb[0].mxu0
        %928 = vmatprep.mubr.f32.mxu0 0.0
        %929 = vmatmul.mubr.f32.gmra.mrb[0].mxu0 %v723
        %v930 = vpop.f32.mrb[0].mxu0
        %v931 = vadd.f32 0.0, %v930
        %v932 = vpop.f32.mrb[0].mxu0
        %933 = vmatprep.mubr.f32.mxu0 0.0
        %934 = vmatmul.mubr.f32.gmra.mrb[0].mxu0 %v726
        %v935 = vpop.f32.mrb[0].mxu0
        %v936 = vadd.f32 0.0, %v935
        %v937 = vpop.f32.mrb[0].mxu0
        %938 = vmatprep.mubr.f32.mxu0 0.0
        %939 = vmatmul.mubr.f32.gmra.mrb[0].mxu0 %v729
        %v940 = vpop.f32.mrb[0].mxu0
        %v941 = vadd.f32 0.0, %v940
        %v942 = vpop.f32.mrb[0].mxu0
        %943 = vmatprep.mubr.f32.mxu0 0.0
        %944 = vmatmul.mubr.f32.gmra.mrb[0].mxu0 %v732
        %v945 = vpop.f32.mrb[0].mxu0
        %v946 = vadd.f32 0.0, %v945
        %v947 = vpop.f32.mrb[0].mxu0
        %948 = vmatprep.mubr.f32.mxu0 0.0
        %949 = vmatmul.mubr.f32.gmra.mrb[0].mxu0 %v735
        %v950 = vpop.f32.mrb[0].mxu0
        %v951 = vadd.f32 0.0, %v950
        %v952 = vpop.f32.mrb[0].mxu0
        %953 = vmatprep.mubr.f32.mxu0 0.0
        %954 = vmatmul.mubr.f32.gmra.mrb[0].mxu0 %v738
        %v955 = vpop.f32.mrb[0].mxu0
        %v956 = vadd.f32 0.0, %v955
        %v957 = vpop.f32.mrb[0].mxu0
        %958 = vmatprep.mubr.f32.mxu0 0.0
        %959 = vmatmul.mubr.f32.gmra.mrb[0].mxu0 %v741
        %v960 = vpop.f32.mrb[0].mxu0
        %v961 = vadd.f32 0.0, %v960
        %v962 = vpop.f32.mrb[0].mxu0
        %963 = vmatprep.mubr.f32.mxu0 0.0
        %964 = vmatmul.mubr.f32.gmra.mrb[0].mxu0 %v744
        %v965 = vpop.f32.mrb[0].mxu0
        %v966 = vadd.f32 0.0, %v965
        %v967 = vpop.f32.mrb[0].mxu0
        %968 = vmatprep.mubr.f32.mxu0 0.0
        %969 = vmatmul.mubr.f32.gmra.mrb[0].mxu0 %v747
        %v970 = vpop.f32.mrb[0].mxu0
        %v971 = vadd.f32 0.0, %v970
        %v972 = vpop.f32.mrb[0].mxu0
        %973 = vdwg.mxu0
        %v974 = vmax.f32 %v816, %v836
        %v975 = vmax.f32 %v821, %v841
        %v976 = vmax.f32 %v826, %v846
        %v977 = vmax.f32 %v831, %v851
        %v978 = vmax.f32 %v974, %v856
        %v979 = vmax.f32 %v975, %v861
        %v980 = vmax.f32 %v976, %v866
        %v981 = vmax.f32 %v977, %v871
        %v982 = vmax.f32 %v978, %v876
        %v983 = vmax.f32 %v979, %v881
        %v984 = vmax.f32 %v980, %v886
        %v985 = vmax.f32 %v981, %v891
        %v986 = vmax.f32 %v982, %v896
        %v987 = vmax.f32 %v983, %v901
        %v988 = vmax.f32 %v984, %v906
        %v989 = vmax.f32 %v985, %v911
        %v990 = vmax.f32 %v986, %v916
        %v991 = vmax.f32 %v987, %v921
        %v992 = vmax.f32 %v988, %v926
        %v993 = vmax.f32 %v989, %v931
        %v994 = vmax.f32 %v990, %v936
        %v995 = vmax.f32 %v991, %v941
        %v996 = vmax.f32 %v992, %v946
        %v997 = vmax.f32 %v993, %v951
        %v998 = vmax.f32 %v994, %v956
        %v999 = vmax.f32 %v995, %v961
        %v1000 = vmax.f32 %v996, %v966
        %v1001 = vmax.f32 %v997, %v971
        %v1002 = vmax.f32 %v998, %v999
        %v1003 = vmax.f32 %v1000, %v1001
        %v1004 = vmax.f32 %v1002, %v1003
        %v1005 = vrot.slane %v1004, 4
        %v1006 = vmax.f32 %v1004, %v1005
        %v1007 = vrot.slane %v1006, 2
        %v1008 = vmax.f32 %v1006, %v1007
        %v1009 = vrot.slane %v1008, 1
        %v1010 = vmax.f32 %v1008, %v1009
        %v1011 = vsub.f32 %v816, %v1010
        %v1012 = vsub.f32 %v821, %v1010
        %v1013 = vsub.f32 %v826, %v1010
        %v1014 = vsub.f32 %v831, %v1010
        %v1015 = vsub.f32 %v836, %v1010
        %v1016 = vsub.f32 %v841, %v1010
        %v1017 = vsub.f32 %v846, %v1010
        %v1018 = vsub.f32 %v851, %v1010
        %v1019 = vsub.f32 %v856, %v1010
        %v1020 = vsub.f32 %v861, %v1010
        %v1021 = vsub.f32 %v866, %v1010
        %v1022 = vsub.f32 %v871, %v1010
        %v1023 = vsub.f32 %v876, %v1010
        %v1024 = vsub.f32 %v881, %v1010
        %v1025 = vsub.f32 %v886, %v1010
        %v1026 = vsub.f32 %v891, %v1010
        %v1027 = vsub.f32 %v896, %v1010
        %v1028 = vsub.f32 %v901, %v1010
        %v1029 = vsub.f32 %v906, %v1010
        %v1030 = vsub.f32 %v911, %v1010
        %v1031 = vsub.f32 %v916, %v1010
        %v1032 = vsub.f32 %v921, %v1010
        %v1033 = vsub.f32 %v926, %v1010
        %v1034 = vsub.f32 %v931, %v1010
        %v1035 = vsub.f32 %v936, %v1010
        %v1036 = vsub.f32 %v941, %v1010
        %v1037 = vsub.f32 %v946, %v1010
        %v1038 = vsub.f32 %v951, %v1010
        %v1039 = vsub.f32 %v956, %v1010
        %v1040 = vsub.f32 %v961, %v1010
        %v1041 = vsub.f32 %v966, %v1010
        %v1042 = vsub.f32 %v971, %v1010
        %v1043 = vmul.f32 %v1011, 1.442695
        %v1044 = vpow.pop %v1043
        %v1045 = vmul.f32 %v1012, 1.442695
        %v1046 = vpow.pop %v1045
        %v1047 = vmul.f32 %v1013, 1.442695
        %v1048 = vpow.pop %v1047
        %v1049 = vmul.f32 %v1014, 1.442695
        %v1050 = vpow.pop %v1049
        %v1051 = vmul.f32 %v1015, 1.442695
        %v1052 = vpow.pop %v1051
        %v1053 = vmul.f32 %v1016, 1.442695
        %v1054 = vpow.pop %v1053
        %v1055 = vmul.f32 %v1017, 1.442695
        %v1056 = vpow.pop %v1055
        %v1057 = vmul.f32 %v1018, 1.442695
        %v1058 = vpow.pop %v1057
        %v1059 = vmul.f32 %v1019, 1.442695
        %v1060 = vpow.pop %v1059
        %v1061 = vmul.f32 %v1020, 1.442695
        %v1062 = vpow.pop %v1061
        %v1063 = vmul.f32 %v1021, 1.442695
        %v1064 = vpow.pop %v1063
        %v1065 = vmul.f32 %v1022, 1.442695
        %v1066 = vpow.pop %v1065
        %v1067 = vmul.f32 %v1023, 1.442695
        %v1068 = vpow.pop %v1067
        %v1069 = vmul.f32 %v1024, 1.442695
        %v1070 = vpow.pop %v1069
        %v1071 = vmul.f32 %v1025, 1.442695
        %v1072 = vpow.pop %v1071
        %v1073 = vmul.f32 %v1026, 1.442695
        %v1074 = vpow.pop %v1073
        %v1075 = vmul.f32 %v1027, 1.442695
        %v1076 = vpow.pop %v1075
        %v1077 = vmul.f32 %v1028, 1.442695
        %v1078 = vpow.pop %v1077
        %v1079 = vmul.f32 %v1029, 1.442695
        %v1080 = vpow.pop %v1079
        %v1081 = vmul.f32 %v1030, 1.442695
        %v1082 = vpow.pop %v1081
        %v1083 = vmul.f32 %v1031, 1.442695
        %v1084 = vpow.pop %v1083
        %v1085 = vmul.f32 %v1032, 1.442695
        %v1086 = vpow.pop %v1085
        %v1087 = vmul.f32 %v1033, 1.442695
        %v1088 = vpow.pop %v1087
        %v1089 = vmul.f32 %v1034, 1.442695
        %v1090 = vpow.pop %v1089
        %v1091 = vmul.f32 %v1035, 1.442695
        %v1092 = vpow.pop %v1091
        %v1093 = vmul.f32 %v1036, 1.442695
        %v1094 = vpow.pop %v1093
        %v1095 = vmul.f32 %v1037, 1.442695
        %v1096 = vpow.pop %v1095
        %v1097 = vmul.f32 %v1038, 1.442695
        %v1098 = vpow.pop %v1097
        %v1099 = vmul.f32 %v1039, 1.442695
        %v1100 = vpow.pop %v1099
        %v1101 = vmul.f32 %v1040, 1.442695
        %v1102 = vpow.pop %v1101
        %v1103 = vmul.f32 %v1041, 1.442695
        %v1104 = vpow.pop %v1103
        %v1105 = vmul.f32 %v1042, 1.442695
        %v1106 = vpow.pop %v1105
        %v1107 = vadd.f32 %v1044, %v1046
        %v1108 = vadd.f32 %v1107, %v1048
        %v1109 = vadd.f32 %v1108, %v1050
        %v1110 = vadd.f32 %v1109, %v1052
        %v1111 = vadd.f32 %v1110, %v1054
        %v1112 = vadd.f32 %v1111, %v1056
        %v1113 = vadd.f32 %v1112, %v1058
        %v1114 = vadd.f32 %v1113, %v1060
        %v1115 = vadd.f32 %v1114, %v1062
        %v1116 = vadd.f32 %v1115, %v1064
        %v1117 = vadd.f32 %v1116, %v1066
        %v1118 = vadd.f32 %v1117, %v1068
        %v1119 = vadd.f32 %v1118, %v1070
        %v1120 = vadd.f32 %v1119, %v1072
        %v1121 = vadd.f32 %v1120, %v1074
        %v1122 = vadd.f32 %v1121, %v1076
        %v1123 = vadd.f32 %v1122, %v1078
        %v1124 = vadd.f32 %v1123, %v1080
        %v1125 = vadd.f32 %v1124, %v1082
        %v1126 = vadd.f32 %v1125, %v1084
        %v1127 = vadd.f32 %v1126, %v1086
        %v1128 = vadd.f32 %v1127, %v1088
        %v1129 = vadd.f32 %v1128, %v1090
        %v1130 = vadd.f32 %v1129, %v1092
        %v1131 = vadd.f32 %v1130, %v1094
        %v1132 = vadd.f32 %v1131, %v1096
        %v1133 = vadd.f32 %v1132, %v1098
        %v1134 = vadd.f32 %v1133, %v1100
        %v1135 = vadd.f32 %v1134, %v1102
        %v1136 = vadd.f32 %v1135, %v1104
        %v1137 = vadd.f32 %v1136, %v1106
        %v1138 = vrot.slane %v1137, 4
        %v1139 = vadd.f32 %v1137, %v1138
        %v1140 = vrot.slane %v1139, 2
        %v1141 = vadd.f32 %v1139, %v1140
        %v1142 = vrot.slane %v1141, 1
        %v1143 = vadd.f32 %v1141, %v1142
        %v1144 = vrcp.pop %v1143
        %v1145 = vmul.f32 %v1044, %v1144
        %v1146 = vmul.f32 %v1046, %v1144
        %v1147 = vmul.f32 %v1048, %v1144
        %v1148 = vmul.f32 %v1050, %v1144
        %v1149 = vmul.f32 %v1052, %v1144
        %v1150 = vmul.f32 %v1054, %v1144
        %v1151 = vmul.f32 %v1056, %v1144
        %v1152 = vmul.f32 %v1058, %v1144
        %v1153 = vmul.f32 %v1060, %v1144
        %v1154 = vmul.f32 %v1062, %v1144
        %v1155 = vmul.f32 %v1064, %v1144
        %v1156 = vmul.f32 %v1066, %v1144
        %v1157 = vmul.f32 %v1068, %v1144
        %v1158 = vmul.f32 %v1070, %v1144
        %v1159 = vmul.f32 %v1072, %v1144
        %v1160 = vmul.f32 %v1074, %v1144
        %v1161 = vmul.f32 %v1076, %v1144
        %v1162 = vmul.f32 %v1078, %v1144
        %v1163 = vmul.f32 %v1080, %v1144
        %v1164 = vmul.f32 %v1082, %v1144
        %v1165 = vmul.f32 %v1084, %v1144
        %v1166 = vmul.f32 %v1086, %v1144
        %v1167 = vmul.f32 %v1088, %v1144
        %v1168 = vmul.f32 %v1090, %v1144
        %v1169 = vmul.f32 %v1092, %v1144
        %v1170 = vmul.f32 %v1094, %v1144
        %v1171 = vmul.f32 %v1096, %v1144
        %v1172 = vmul.f32 %v1098, %v1144
        %v1173 = vmul.f32 %v1100, %v1144
        %v1174 = vmul.f32 %v1102, %v1144
        %v1175 = vmul.f32 %v1104, %v1144
        %v1176 = vmul.f32 %v1106, %v1144
        %1177 = vxpose.xlu0.b32.start [1/16] %v1145, 128
        %1178 = vxpose.xlu0.b32.cont [2/16] %v1146, 128
        %1179 = vxpose.xlu0.b32.cont [3/16] %v1147, 128
        %1180 = vxpose.xlu0.b32.cont [4/16] %v1148, 128
        %1181 = vxpose.xlu0.b32.cont [5/16] %v1149, 128
        %1182 = vxpose.xlu0.b32.cont [6/16] %v1150, 128
        %1183 = vxpose.xlu0.b32.cont [7/16] %v1151, 128
        %1184 = vxpose.xlu0.b32.cont [8/16] %v1152, 128
        %1185 = vxpose.xlu0.b32.cont [9/16] %v1153, 128
        %1186 = vxpose.xlu0.b32.cont [10/16] %v1154, 128
        %1187 = vxpose.xlu0.b32.cont [11/16] %v1155, 128
        %1188 = vxpose.xlu0.b32.cont [12/16] %v1156, 128
        %1189 = vxpose.xlu0.b32.cont [13/16] %v1157, 128
        %1190 = vxpose.xlu0.b32.cont [14/16] %v1158, 128
        %1191 = vxpose.xlu0.b32.cont [15/16] %v1159, 128
        %1192 = vxpose.xlu0.b32.end [16/16] %v1160, 128
        %v1193 = vpop.trf.xlu0
        %v1194 = vpop.trf.xlu0
        %v1195 = vpop.trf.xlu0
        %v1196 = vpop.trf.xlu0
        %v1197 = vpop.trf.xlu0
        %v1198 = vpop.trf.xlu0
        %v1199 = vpop.trf.xlu0
        %v1200 = vpop.trf.xlu0
        %v1201 = vpop.trf.xlu0
        %v1202 = vpop.trf.xlu0
        %v1203 = vpop.trf.xlu0
        %v1204 = vpop.trf.xlu0
        %v1205 = vpop.trf.xlu0
        %v1206 = vpop.trf.xlu0
        %v1207 = vpop.trf.xlu0
        %v1208 = vpop.trf.xlu0
        %1209 = vxpose.xlu0.b32.start [1/16] %v1161, 128
        %1210 = vxpose.xlu0.b32.cont [2/16] %v1162, 128
        %1211 = vxpose.xlu0.b32.cont [3/16] %v1163, 128
        %1212 = vxpose.xlu0.b32.cont [4/16] %v1164, 128
        %1213 = vxpose.xlu0.b32.cont [5/16] %v1165, 128
        %1214 = vxpose.xlu0.b32.cont [6/16] %v1166, 128
        %1215 = vxpose.xlu0.b32.cont [7/16] %v1167, 128
        %1216 = vxpose.xlu0.b32.cont [8/16] %v1168, 128
        %1217 = vxpose.xlu0.b32.cont [9/16] %v1169, 128
        %1218 = vxpose.xlu0.b32.cont [10/16] %v1170, 128
        %1219 = vxpose.xlu0.b32.cont [11/16] %v1171, 128
        %1220 = vxpose.xlu0.b32.cont [12/16] %v1172, 128
        %1221 = vxpose.xlu0.b32.cont [13/16] %v1173, 128
        %1222 = vxpose.xlu0.b32.cont [14/16] %v1174, 128
        %1223 = vxpose.xlu0.b32.cont [15/16] %v1175, 128
        %1224 = vxpose.xlu0.b32.end [16/16] %v1176, 128
        %v1225 = vpop.trf.xlu0
        %v1226 = vpop.trf.xlu0
        %v1227 = vpop.trf.xlu0
        %v1228 = vpop.trf.xlu0
        %v1229 = vpop.trf.xlu0
        %v1230 = vpop.trf.xlu0
        %v1231 = vpop.trf.xlu0
        %v1232 = vpop.trf.xlu0
        %v1233 = vpop.trf.xlu0
        %v1234 = vpop.trf.xlu0
        %v1235 = vpop.trf.xlu0
        %v1236 = vpop.trf.xlu0
        %v1237 = vpop.trf.xlu0
        %v1238 = vpop.trf.xlu0
        %v1239 = vpop.trf.xlu0
        %v1240 = vpop.trf.xlu0
        %1241 = vst [vmem:[%s324] sm:$0xff] %v1193
        %1242 = vst [vmem:[%s324 + $0x8] sm:$0xff] %v1225
        %1243 = vst [vmem:[%s324 + $0x10] sm:$0xff] %v1194
        %1244 = vst [vmem:[%s324 + $0x18] sm:$0xff] %v1226
        %1245 = vst [vmem:[%s324 + $0x20] sm:$0xff] %v1195
        %1246 = vst [vmem:[%s324 + $0x28] sm:$0xff] %v1227
        %1247 = vst [vmem:[%s324 + $0x30] sm:$0xff] %v1196
        %1248 = vst [vmem:[%s324 + $0x38] sm:$0xff] %v1228
        %1249 = vst [vmem:[%s324 + $0x40] sm:$0xff] %v1197
        %1250 = vst [vmem:[%s324 + $0x48] sm:$0xff] %v1229
        %1251 = vst [vmem:[%s324 + $0x50] sm:$0xff] %v1198
        %1252 = vst [vmem:[%s324 + $0x58] sm:$0xff] %v1230
        %1253 = vst [vmem:[%s324 + $0x60] sm:$0xff] %v1199
        %1254 = vst [vmem:[%s324 + $0x68] sm:$0xff] %v1231
        %1255 = vst [vmem:[%s324 + $0x70] sm:$0xff] %v1200
        %1256 = vst [vmem:[%s324 + $0x78] sm:$0xff] %v1232
        %1257 = vst [vmem:[%s324 + $0x80] sm:$0xff] %v1201
        %1258 = vst [vmem:[%s324 + $0x88] sm:$0xff] %v1233
        %1259 = vst [vmem:[%s324 + $0x90] sm:$0xff] %v1202
        %1260 = vst [vmem:[%s324 + $0x98] sm:$0xff] %v1234
        %1261 = vst [vmem:[%s324 + $0xa0] sm:$0xff] %v1203
        %1262 = vst [vmem:[%s324 + $0xa8] sm:$0xff] %v1235
        %1263 = vst [vmem:[%s324 + $0xb0] sm:$0xff] %v1204
        %1264 = vst [vmem:[%s324 + $0xb8] sm:$0xff] %v1236
        %1265 = vst [vmem:[%s324 + $0xc0] sm:$0xff] %v1205
        %1266 = vst [vmem:[%s324 + $0xc8] sm:$0xff] %v1237
        %1267 = vst [vmem:[%s324 + $0xd0] sm:$0xff] %v1206
        %1268 = vst [vmem:[%s324 + $0xd8] sm:$0xff] %v1238
        %1269 = vst [vmem:[%s324 + $0xe0] sm:$0xff] %v1207
        %1270 = vst [vmem:[%s324 + $0xe8] sm:$0xff] %v1239
        %1271 = vst [vmem:[%s324 + $0xf0] sm:$0xff] %v1208
        %1272 = vst [vmem:[%s324 + $0xf8] sm:$0xff] %v1240
        %v1273 = vld [vmem:[#allocation3] sm:$0xff]
        %v1274 = vld [vmem:[#allocation3 + $0x8] sm:$0xff]
        %v1275 = vld [vmem:[#allocation3 + $0x10] sm:$0xff]
        %v1276 = vld [vmem:[#allocation3 + $0x18] sm:$0xff]
        %v1277 = vpack.c.bf16 %v1146, %v1145
        %v1278 = vpack.c.bf16 %v1148, %v1147
        %v1279 = vpack.c.bf16 %v1150, %v1149
        %v1280 = vpack.c.bf16 %v1152, %v1151
        %v1281 = vpack.c.bf16 %v1154, %v1153
        %v1282 = vpack.c.bf16 %v1156, %v1155
        %v1283 = vpack.c.bf16 %v1158, %v1157
        %v1284 = vpack.c.bf16 %v1160, %v1159
        %v1285 = vpack.c.bf16 %v1162, %v1161
        %v1286 = vpack.c.bf16 %v1164, %v1163
        %v1287 = vpack.c.bf16 %v1166, %v1165
        %v1288 = vpack.c.bf16 %v1168, %v1167
        %v1289 = vpack.c.bf16 %v1170, %v1169
        %v1290 = vpack.c.bf16 %v1172, %v1171
        %v1291 = vpack.c.bf16 %v1174, %v1173
        %v1292 = vpack.c.bf16 %v1176, %v1175
        %1293 = vmatprep.subr.bf16.mxu0 0
        %1294 = vmatpush1.bf16.msra.mxu0 %v1277
        %1295 = vmatprep.subr.bf16.mxu0 0
        %1296 = vmatpush1.bf16.msra.mxu0 %v1278
        %1297 = vmatprep.subr.bf16.mxu0 0
        %1298 = vmatpush1.bf16.msra.mxu0 %v1279
        %1299 = vmatprep.subr.bf16.mxu0 0
        %1300 = vmatpush1.bf16.msra.mxu0 %v1280
        %1301 = vmatprep.subr.bf16.mxu0 0
        %1302 = vmatpush1.bf16.msra.mxu0 %v1281
        %1303 = vmatprep.subr.bf16.mxu0 0
        %1304 = vmatpush1.bf16.msra.mxu0 %v1282
        %1305 = vmatprep.subr.bf16.mxu0 0
        %1306 = vmatpush1.bf16.msra.mxu0 %v1283
        %1307 = vmatprep.subr.bf16.mxu0 0
        %1308 = vmatpush1.bf16.msra.mxu0 %v1284
        %1309 = vmatprep.subr.bf16.mxu0 0
        %1310 = vmatpush1.bf16.msra.mxu0 %v1285
        %1311 = vmatprep.subr.bf16.mxu0 0
        %1312 = vmatpush1.bf16.msra.mxu0 %v1286
        %1313 = vmatprep.subr.bf16.mxu0 0
        %1314 = vmatpush1.bf16.msra.mxu0 %v1287
        %1315 = vmatprep.subr.bf16.mxu0 0
        %1316 = vmatpush1.bf16.msra.mxu0 %v1288
        %1317 = vmatprep.subr.bf16.mxu0 0
        %1318 = vmatpush1.bf16.msra.mxu0 %v1289
        %1319 = vmatprep.subr.bf16.mxu0 0
        %1320 = vmatpush1.bf16.msra.mxu0 %v1290
        %1321 = vmatprep.subr.bf16.mxu0 0
        %1322 = vmatpush1.bf16.msra.mxu0 %v1291
        %1323 = vmatprep.subr.bf16.mxu0 0
        %1324 = vmatpush1.bf16.msra.mxu0 %v1292
        %1325 = vmatprep.mubr.bf16.mxu0 %v1274
        %1326 = vmatmul.mubr.bf16.gmra.mrb[0].mxu0 %v1273
        %v1327 = vpop.f32.mrb[0].mxu0
        %v1328 = vadd.f32 0.0, %v1327
        %v1329 = vpop.f32.mrb[0].mxu0
        %v1330 = vpop.f32.mrb[0].mxu0
        %v1331 = vadd.f32 0.0, %v1330
        %v1332 = vpop.f32.mrb[0].mxu0
        %1333 = vmatprep.mubr.bf16.mxu0 %v1276
        %1334 = vmatmul.mubr.bf16.gmra.mrb[0].mxu0 %v1275
        %v1335 = vpop.f32.mrb[0].mxu0
        %v1336 = vadd.f32 0.0, %v1335
        %v1337 = vpop.f32.mrb[0].mxu0
        %v1338 = vpop.f32.mrb[0].mxu0
        %v1339 = vadd.f32 0.0, %v1338
        %v1340 = vpop.f32.mrb[0].mxu0
        %1341 = vdwg.mxu0
        %s1342 = sld [smem:[#allocation4]]
        %v1343 = vstv %s1342
        %v1344 = vmul.f32 %v1343, %v1328
        %v1345 = vmul.f32 %v1343, %v1331
        %v1346 = vmul.f32 %v1343, %v1336
        %v1347 = vmul.f32 %v1343, %v1339
        %v1348 = vadd.f32 %v1344, %v501
        %v1349 = vadd.f32 %v1345, %v502
        %v1350 = vadd.f32 %v1346, %v503
        %v1351 = vadd.f32 %v1347, %v504
        %1352 = vst [vmem:[%s317] sm:$0xff] %v1348
        %1353 = vst [vmem:[%s317 + $0x8] sm:$0xff] %v1349
        %1354 = vst [vmem:[%s317 + $0x10] sm:$0xff] %v1350
        %1355 = vst [vmem:[%s317 + $0x18] sm:$0xff] %v1351
        %s1356 = sand.u32 %s182, 1
        %s1357 = scalar_lea.sflag [#allocation7], %s1356
        %s1358 = sand.u32 %s182, 1
        %s1359 = smul.addr %s1358, 32
        %s1360 = scalar_lea.vmem [#allocation8], %s1359
        %s1361 = sand.u32 %s210, 1
        %s1362 = scalar_lea.sflag [#allocation10], %s1361
        %s1363 = sand.u32 %s210, 1
        %s1364 = smul.addr %s1363, 256
        %s1365 = scalar_lea.vmem [#allocation9], %s1364
        // Predicated region
        $region60: #{tpu_custom_call.1} parent=43 // pred_check
          %p1366 = pneg %p192
        $region61: #{tpu_custom_call.1} parent=43 // pred_check_branch
          %1368 = sbr.rel (%p1366) target = $region63
        $region62: #{tpu_custom_call.1} parent=43 // pred_region
          %s1370 = ssub.s32 512, 512
          %1371 = vsyncadd %s1357, %s1370
          %s1372 = smul.addr %s33, 8
          %s1373 = sadd.s32 %s34, %s1372
          %s1374 = smul.addr %s1373, 128
          %s1375 = scalar_lea.hbm %s6, %s1374
          %s1376 = sshll.u32 %s1360, 4
          %s1377 = int_to_ptr.vmem [resolvable:$true] %s1376
          %1382 = dma.vmem_to_hbm [thread:$0]  %s1377, 512, %s1375, %s1357, 128, 256, 8
        $region63: #{tpu_custom_call.1} parent=43 // pred_fallthru
          _
        // Predicated region
        $region64: #{tpu_custom_call.1} parent=43 // pred_check
          %p1383 = pneg %p220
        $region65: #{tpu_custom_call.1} parent=43 // pred_check_branch
          %1385 = sbr.rel (%p1383) target = $region67
        $region66: #{tpu_custom_call.1} parent=43 // pred_region
          %s1386 = smul.u32 16, %s34
          %s1388 = ssub.s32 4096, 4096
          %1389 = vsyncadd %s1362, %s1388
          %s1390 = smul.addr %s1386, 2
          %s1391 = smul.addr %s33, 64
          %s1392 = sadd.s32 %s1390, %s1391
          %s1393 = smul.addr %s1392, 128
          %s1394 = scalar_lea.hbm %s7, %s1393
          %s1395 = sshll.u32 %s1365, 4
          %s1396 = int_to_ptr.vmem [resolvable:$true] %s1395
          %1401 = dma.vmem_to_hbm [thread:$0]  %s1396, 4096, %s1394, %s1362, 256, 256, 16
        $region67: #{tpu_custom_call.1} parent=43 // pred_fallthru
          _
      $region44: #{tpu_custom_call.1} parent=5 // pred_fallthru
        _
      %p1402 = scmp.le.s32.totalorder 2, %s24
      // Predicated region
      $region68: #{tpu_custom_call.1} parent=5 // pred_check
        %p1403 = pneg %p1402
      $region69: #{tpu_custom_call.1} parent=5 // pred_check_branch
        %1405 = sbr.rel (%p1403) target = $region71
      $region70: #{tpu_custom_call.1} parent=5 // pred_region
        %s1406 = ssub.s32 %s24, 2
        // Predicated region
        $region72: #{tpu_custom_call.1} parent=70 // pred_check
          %p1407 = pneg %p198
        $region73: #{tpu_custom_call.1} parent=70 // pred_check_branch
          %1409 = sbr.rel (%p1407) target = $region75
        $region74: #{tpu_custom_call.1} parent=70 // pred_region
          %s1410 = sand.u32 %s183, 1
          %s1411 = scalar_lea.sflag [#allocation7], %s1410
          %s1412 = sand.u32 %s183, 1
          %s1413 = smul.addr %s1412, 32
          %s1414 = scalar_lea.vmem [#allocation8], %s1413
          %1415 = dma.done %s1411, 512
        $region75: #{tpu_custom_call.1} parent=70 // pred_fallthru
          _
        // Predicated region
        $region76: #{tpu_custom_call.1} parent=70 // pred_check
          %p1416 = pneg %p226
        $region77: #{tpu_custom_call.1} parent=70 // pred_check_branch
          %1418 = sbr.rel (%p1416) target = $region79
        $region78: #{tpu_custom_call.1} parent=70 // pred_region
          %s1419 = sand.u32 %s211, 1
          %s1420 = scalar_lea.sflag [#allocation10], %s1419
          %s1421 = sand.u32 %s211, 1
          %s1422 = smul.addr %s1421, 256
          %s1423 = scalar_lea.vmem [#allocation9], %s1422
          %1424 = dma.done %s1420, 4096
        $region79: #{tpu_custom_call.1} parent=70 // pred_fallthru
          _
      $region71: #{tpu_custom_call.1} parent=5 // pred_fallthru
        _
    $region6: #{tpu_custom_call.1} parent=1 // loop_footer
      %s28 = sadd.s32 1, %s24
    $region7: #{tpu_custom_call.1} parent=1 // loop_footer_branch
      %23 = sbr.rel target = $region3
    $region8: #{tpu_custom_call.1} parent=1 // loop_exit
      _
    %1425 = vsyncpa [#allocation6], 1
    %s1426 = scalar_lea.sflag [#allocation6], 1
    %1427 = vsyncpa %s1426, 1
    %1428 = vsyncpa [#allocation7], 1
    %s1429 = scalar_lea.sflag [#allocation7], 1
    %1430 = vsyncpa %s1429, 1
    %1431 = vsyncpa [#allocation10], 1
    %s1432 = scalar_lea.sflag [#allocation10], 1
    %1433 = vsyncpa %s1432, 1

</llo_original>
